<compile_context>
chip_gen: v7x
topology: tpu7x:2x2x1
jax: 0.10.0
libtpu: 0.0.40
codegen_flags: <defaults>
</compile_context>

<pallas_src>
import functools
import math

import jax
import jax.numpy as jnp
from jax import lax
from jax.experimental import pallas as pl
from jax.experimental.pallas import tpu as pltpu

LN_EPS = 1e-5
NEG_BIG = -1e30                      # finite mask value (NaN-safe vs -inf)
INV_SQRT2 = 1.0 / math.sqrt(2.0)


def _layernorm(x, g, b):
    mu = jnp.mean(x, axis=-1, keepdims=True)
    xc = x - mu
    var = jnp.mean(xc * xc, axis=-1, keepdims=True)
    return xc * lax.rsqrt(var + LN_EPS) * g + b


def _erf_poly(x):
    # Abramowitz & Stegun 7.1.26, max abs error ~1.5e-7; uses only exp/mul/add/
    # div/select so it is guaranteed to lower in Mosaic on every TPU gen.
    # TODO(synk): switch to lax.erf once its Mosaic lowering is confirmed.
    p = 0.3275911
    a1, a2, a3, a4, a5 = (0.254829592, -0.284496736, 1.421413741,
                          -1.453152027, 1.061405429)
    ax = jnp.abs(x)
    t = 1.0 / (1.0 + p * ax)
    poly = ((((a5 * t + a4) * t + a3) * t + a2) * t + a1) * t
    y = 1.0 - poly * jnp.exp(-ax * ax)
    return jnp.where(x >= 0.0, y, -y)


def _gelu_exact(x):
    # PyTorch nn.GELU() default = exact erf formulation.
    return 0.5 * x * (1.0 + _erf_poly(x * INV_SQRT2))


def _block_kernel(x_ref, g1_ref, b1_ref, wqkv_ref, bqkv_ref, wp_ref, bp_ref,
                  g2_ref, b2_ref, w1_ref, bm1_ref, w2_ref, bm2_ref,
                  o_ref, ctx_ref, *, batch_block, seq_len, n_head, head_size):
    f32 = jnp.float32
    bb, S, D = batch_block, seq_len, head_size
    x = x_ref[...].astype(f32)                                  # (rows, H)
    rows, H = x.shape

    # ---- LayerNorm 1 -------------------------------------------------------
    h1 = _layernorm(x, g1_ref[...], b1_ref[...])

    # ---- fused q/k/v projection for all heads (one MXU matmul) -------------
    qkv = jnp.dot(h1, wqkv_ref[...], preferred_element_type=f32) + bqkv_ref[...]
    scale = 1.0 / math.sqrt(D)
    q = (qkv[:, 0 * H:1 * H] * scale).reshape(bb, S, H)         # scale folded in
    k = qkv[:, 1 * H:2 * H].reshape(bb, S, H)
    v = qkv[:, 2 * H:3 * H].reshape(bb, S, H)

    # causal additive bias, built once, shared by every head / batch row
    row_ids = lax.broadcasted_iota(jnp.int32, (S, S), 0)
    col_ids = lax.broadcasted_iota(jnp.int32, (S, S), 1)
    causal_bias = jnp.where(col_ids <= row_ids, 0.0, NEG_BIG).astype(f32)

    # ---- per-head attention, batched over the folded batch dim -------------
    for h in range(n_head):                                     # static unroll
        lo = h * D
        qh = q[:, :, lo:lo + D]
        kh = k[:, :, lo:lo + D]
        vh = v[:, :, lo:lo + D]
        # q @ k^T without materializing a transpose.
        s = jnp.einsum('bqd,bkd->bqk', qh, kh, preferred_element_type=f32)
        s = s + causal_bias[None]
        m = jnp.max(s, axis=-1, keepdims=True)
        e = jnp.exp(s - m)
        p = e / jnp.sum(e, axis=-1, keepdims=True)              # exact division
        # attention-prob dropout: identity (eval mode)
        ctxh = jnp.einsum('bqk,bkd->bqd', p, vh, preferred_element_type=f32)
        ctx_ref[:, lo:lo + D] = ctxh.reshape(rows, D)           # no concat relayout

    ctx = ctx_ref[...]

    # ---- attention output projection + residual ----------------------------
    att = jnp.dot(ctx, wp_ref[...], preferred_element_type=f32) + bp_ref[...]
    x1 = x + att                                                # dropout = identity

    # ---- LayerNorm 2 + MLP + residual ---------------------------------------
    h2 = _layernorm(x1, g2_ref[...], b2_ref[...])
    m1 = _gelu_exact(jnp.dot(h2, w1_ref[...], preferred_element_type=f32)
                     + bm1_ref[...])
    m2 = jnp.dot(m1, w2_ref[...], preferred_element_type=f32) + bm2_ref[...]
    o_ref[...] = (x1 + m2).astype(o_ref.dtype)                  # dropout = identity


def block_forward(x, params, *, n_head, head_size, batch_block=None):
    """x: (B, S, H). Returns (B, S, H) = Block.forward(x) in eval mode."""
    B, S, H = x.shape
    d_ff = 4 * H

    # Fuse per-head q/k/v linears into a single (H, 3H) weight / (1, 3H) bias.
    heads = params["heads"]
    wq = jnp.concatenate([heads[h]["wq"] for h in range(n_head)], axis=1)
    wk = jnp.concatenate([heads[h]["wk"] for h in range(n_head)], axis=1)
    wv = jnp.concatenate([heads[h]["wv"] for h in range(n_head)], axis=1)
    bq = jnp.concatenate([heads[h]["bq"] for h in range(n_head)], axis=1)
    bk = jnp.concatenate([heads[h]["bk"] for h in range(n_head)], axis=1)
    bv = jnp.concatenate([heads[h]["bv"] for h in range(n_head)], axis=1)
    wqkv = jnp.concatenate([wq, wk, wv], axis=1)                # (H, 3H)
    bqkv = jnp.concatenate([bq, bk, bv], axis=1)                # (1, 3H)

    # Batch folding: 2 grid steps when possible (shards across v7x's 2 TCs),
    # each step processing bb = B/2 batch elements as a (bb*S, H) row slab.
    if batch_block is None:
        batch_block = B // 2 if (B % 2 == 0 and B >= 2) else B
    assert B % batch_block == 0
    n_blocks = B // batch_block
    rows = batch_block * S

    x2 = x.reshape(B * S, H)                 # fold batch into the matmul M dim

    def const(shape):
        # Grid-invariant weight/bias block (same tile every step).
        # TODO(synk): pipeline_mode=pl.Buffered(1) here once shapes grow.
        return pl.BlockSpec(shape, lambda i: (0,) * len(shape))

    kernel = functools.partial(_block_kernel, batch_block=batch_block,
                               seq_len=S, n_head=n_head, head_size=head_size)

    args = (x2, params["g1"], params["b1"], wqkv, bqkv,
            params["wp"], params["bp"], params["g2"], params["b2"],
            params["w1"], params["bm1"], params["w2"], params["bm2"])

    flops = (2 * B * S * H * 3 * H                       # fused qkv projection
             + 2 * B * n_head * S * S * head_size * 2    # scores + probs@v
             + 2 * B * S * H * H                         # output projection
             + 2 * B * S * H * d_ff * 2)                 # MLP fc1 + fc2
    transcendentals = B * n_head * S * S + B * S * d_ff + 2 * B * S
    bytes_accessed = 4 * (sum(int(a.size) for a in args) + B * S * H)

    out2 = pl.pallas_call(
        kernel,
        out_shape=jax.ShapeDtypeStruct((B * S, H), x.dtype),
        grid_spec=pltpu.PrefetchScalarGridSpec(
            num_scalar_prefetch=0,
            grid=(n_blocks,),
            in_specs=[
                pl.BlockSpec((rows, H), lambda i: (i, 0)),      # folded activations
                const((1, H)), const((1, H)),                   # ln1 gamma/beta
                const((H, 3 * H)), const((1, 3 * H)),           # fused qkv
                const((H, H)), const((1, H)),                   # attn out proj
                const((1, H)), const((1, H)),                   # ln2 gamma/beta
                const((H, d_ff)), const((1, d_ff)),             # mlp fc1
                const((d_ff, H)), const((1, H)),                # mlp fc2
            ],
            out_specs=pl.BlockSpec((rows, H), lambda i: (i, 0)),
            scratch_shapes=[pltpu.VMEM((rows, H), jnp.float32)],  # per-head ctx
        ),
        compiler_params=pltpu.CompilerParams(
            dimension_semantics=("parallel",),
            vmem_limit_bytes=32 * 1024 * 1024),
        cost_estimate=pl.CostEstimate(
            flops=flops, transcendentals=transcendentals,
            bytes_accessed=bytes_accessed),
    )(*args)
    return out2.reshape(B, S, H)


def reference(x, params, *, n_head, head_size):
    """Plain-JAX reference mirroring the PyTorch Block forward (eval mode)."""
    def layernorm(v, g, b):
        mu = v.mean(-1, keepdims=True)
        var = ((v - mu) ** 2).mean(-1, keepdims=True)
        return (v - mu) / jnp.sqrt(var + LN_EPS) * g + b

    S = x.shape[1]
    mask = jnp.tril(jnp.ones((S, S), dtype=bool))

    h1 = layernorm(x, params["g1"], params["b1"])
    outs = []
    for h in range(n_head):
        p = params["heads"][h]
        q = h1 @ p["wq"] + p["bq"]
        k = h1 @ p["wk"] + p["bk"]
        v = h1 @ p["wv"] + p["bv"]
        w = jnp.einsum("bqd,bkd->bqk", q, k)
        w = jnp.where(mask[None], w, -jnp.inf)
        w = jax.nn.softmax(w / math.sqrt(head_size), axis=-1)
        outs.append(w @ v)
    att = jnp.concatenate(outs, axis=-1) @ params["wp"] + params["bp"]
    x1 = x + att
    h2 = layernorm(x1, params["g2"], params["b2"])
    m = jax.nn.gelu(h2 @ params["w1"] + params["bm1"], approximate=False)
    m = m @ params["w2"] + params["bm2"]
    return x1 + m


if __name__ == "__main__":
    # config: hidden_dim=32, head_size=16 -> n_head=2, seq_len=8, batch=2
    B, S, H, D, n_head = 2, 8, 32, 16, 2
    d_ff = 4 * H

    key = jax.random.PRNGKey(0)
    keys = list(jax.random.split(key, 32))
    ki = iter(keys)

    def linear(kw, kb, fan_in, fan_out):
        bound = 1.0 / math.sqrt(fan_in)
        w = jax.random.uniform(kw, (fan_in, fan_out), jnp.float32, -bound, bound)
        b = jax.random.uniform(kb, (1, fan_out), jnp.float32, -bound, bound)
        return w, b

    x = jax.random.normal(next(ki), (B, S, H), dtype=jnp.float32)

    heads = []
    for _ in range(n_head):
        wq, bq = linear(next(ki), next(ki), H, D)
        wk, bk = linear(next(ki), next(ki), H, D)
        wv, bv = linear(next(ki), next(ki), H, D)
        heads.append(dict(wq=wq, bq=bq, wk=wk, bk=bk, wv=wv, bv=bv))
    wp, bp = linear(next(ki), next(ki), H, H)
    w1, bm1 = linear(next(ki), next(ki), H, d_ff)
    w2, bm2 = linear(next(ki), next(ki), d_ff, H)

    params = dict(
        g1=jnp.ones((1, H), jnp.float32), b1=jnp.zeros((1, H), jnp.float32),
        g2=jnp.ones((1, H), jnp.float32), b2=jnp.zeros((1, H), jnp.float32),
        heads=heads, wp=wp, bp=bp, w1=w1, bm1=bm1, w2=w2, bm2=bm2)

    out = block_forward(x, params, n_head=n_head, head_size=D)
    out = jax.block_until_ready(out)

    ref = reference(x, params, n_head=n_head, head_size=D)
    assert out.shape == (B, S, H)
    # exact softmax division + erf GELU -> tolerance tightened vs previous 2e-3
    assert jnp.allclose(out, ref, atol=1e-3, rtol=1e-3), "mismatch vs reference"

    print("KERNEL_OK")
</pallas_src>

<mosaic_0001>
module attributes {stable_mosaic.version = 11 : i64} {
  func.func @_block_kernel(%arg0: i32, %arg1: memref<8x32xf32, #tpu.memory_space<vmem>>, %arg2: memref<1x32xf32, #tpu.memory_space<vmem>>, %arg3: memref<1x32xf32, #tpu.memory_space<vmem>>, %arg4: memref<32x96xf32, #tpu.memory_space<vmem>>, %arg5: memref<1x96xf32, #tpu.memory_space<vmem>>, %arg6: memref<32x32xf32, #tpu.memory_space<vmem>>, %arg7: memref<1x32xf32, #tpu.memory_space<vmem>>, %arg8: memref<1x32xf32, #tpu.memory_space<vmem>>, %arg9: memref<1x32xf32, #tpu.memory_space<vmem>>, %arg10: memref<32x128xf32, #tpu.memory_space<vmem>>, %arg11: memref<1x128xf32, #tpu.memory_space<vmem>>, %arg12: memref<128x32xf32, #tpu.memory_space<vmem>>, %arg13: memref<1x32xf32, #tpu.memory_space<vmem>>, %arg14: memref<8x32xf32, #tpu.memory_space<vmem>>, %arg15: memref<8x32xf32, #tpu.memory_space<vmem>>) attributes {dimension_semantics = [#tpu.dimension_semantics<parallel>], iteration_bounds = array<i64: 2>, scalar_prefetch = 0 : i64, scratch_operands = 1 : i64, tpu.core_type = #tpu.core_type<tc>, window_params = [{transform_indices = @transform_0, window_bounds = array<i64: 8, 32>}, {pipeline_mode = #tpu.pipeline_mode<synchronous>, transform_indices = @transform_1, window_bounds = array<i64: 1, 32>}, {pipeline_mode = #tpu.pipeline_mode<synchronous>, transform_indices = @transform_2, window_bounds = array<i64: 1, 32>}, {pipeline_mode = #tpu.pipeline_mode<synchronous>, transform_indices = @transform_3, window_bounds = array<i64: 32, 96>}, {pipeline_mode = #tpu.pipeline_mode<synchronous>, transform_indices = @transform_4, window_bounds = array<i64: 1, 96>}, {pipeline_mode = #tpu.pipeline_mode<synchronous>, transform_indices = @transform_5, window_bounds = array<i64: 32, 32>}, {pipeline_mode = #tpu.pipeline_mode<synchronous>, transform_indices = @transform_6, window_bounds = array<i64: 1, 32>}, {pipeline_mode = #tpu.pipeline_mode<synchronous>, transform_indices = @transform_7, window_bounds = array<i64: 1, 32>}, {pipeline_mode = #tpu.pipeline_mode<synchronous>, transform_indices = @transform_8, window_bounds = array<i64: 1, 32>}, {pipeline_mode = #tpu.pipeline_mode<synchronous>, transform_indices = @transform_9, window_bounds = array<i64: 32, 128>}, {pipeline_mode = #tpu.pipeline_mode<synchronous>, transform_indices = @transform_10, window_bounds = array<i64: 1, 128>}, {pipeline_mode = #tpu.pipeline_mode<synchronous>, transform_indices = @transform_11, window_bounds = array<i64: 128, 32>}, {pipeline_mode = #tpu.pipeline_mode<synchronous>, transform_indices = @transform_12, window_bounds = array<i64: 1, 32>}, {transform_indices = @transform_13, window_bounds = array<i64: 8, 32>}]} {
    %c0 = arith.constant 0 : index
    %c0_0 = arith.constant 0 : index
    %0 = vector.load %arg1[%c0, %c0_0] : memref<8x32xf32, #tpu.memory_space<vmem>>, vector<8x32xf32>
    %c0_1 = arith.constant 0 : index
    %c0_2 = arith.constant 0 : index
    %1 = vector.load %arg2[%c0_1, %c0_2] : memref<1x32xf32, #tpu.memory_space<vmem>>, vector<1x32xf32>
    %c0_3 = arith.constant 0 : index
    %c0_4 = arith.constant 0 : index
    %2 = vector.load %arg3[%c0_3, %c0_4] : memref<1x32xf32, #tpu.memory_space<vmem>>, vector<1x32xf32>
    %cst = arith.constant dense<0.000000e+00> : vector<8xf32>
    %3 = vector.multi_reduction <add>, %0, %cst [1] : vector<8x32xf32> to vector<8xf32>
    %4 = vector.shape_cast %3 : vector<8xf32> to vector<8x1xf32>
    %cst_5 = arith.constant 3.200000e+01 : f32
    %5 = vector.broadcast %cst_5 : f32 to vector<8x1xf32>
    %6 = arith.divf %4, %5 : vector<8x1xf32>
    %7 = vector.broadcast %6 : vector<8x1xf32> to vector<8x32xf32>
    %8 = arith.subf %0, %7 : vector<8x32xf32>
    %9 = arith.mulf %8, %8 : vector<8x32xf32>
    %cst_6 = arith.constant dense<0.000000e+00> : vector<8xf32>
    %10 = vector.multi_reduction <add>, %9, %cst_6 [1] : vector<8x32xf32> to vector<8xf32>
    %11 = vector.shape_cast %10 : vector<8xf32> to vector<8x1xf32>
    %cst_7 = arith.constant 3.200000e+01 : f32
    %12 = vector.broadcast %cst_7 : f32 to vector<8x1xf32>
    %13 = arith.divf %11, %12 : vector<8x1xf32>
    %cst_8 = arith.constant 9.99999974E-6 : f32
    %14 = vector.broadcast %cst_8 : f32 to vector<8x1xf32>
    %15 = arith.addf %13, %14 : vector<8x1xf32>
    %16 = math.rsqrt %15 : vector<8x1xf32>
    %17 = vector.broadcast %16 : vector<8x1xf32> to vector<8x32xf32>
    %18 = arith.mulf %8, %17 : vector<8x32xf32>
    %19 = vector.broadcast %1 : vector<1x32xf32> to vector<8x32xf32>
    %20 = arith.mulf %18, %19 : vector<8x32xf32>
    %21 = vector.broadcast %2 : vector<1x32xf32> to vector<8x32xf32>
    %22 = arith.addf %20, %21 : vector<8x32xf32>
    %c0_9 = arith.constant 0 : index
    %c0_10 = arith.constant 0 : index
    %23 = vector.load %arg4[%c0_9, %c0_10] : memref<32x96xf32, #tpu.memory_space<vmem>>, vector<32x96xf32>
    %cst_11 = arith.constant dense<0.000000e+00> : vector<8x96xf32>
    %24 = tpu.matmul %22, %23, %cst_11 {dimension_numbers = #tpu.dot_dimension_numbers<[1], [0], [0], [1], [0, 0, 1, 1], [], []>} : vector<8x32xf32>, vector<32x96xf32>, vector<8x96xf32> -> vector<8x96xf32>
    %c0_12 = arith.constant 0 : index
    %c0_13 = arith.constant 0 : index
    %25 = vector.load %arg5[%c0_12, %c0_13] : memref<1x96xf32, #tpu.memory_space<vmem>>, vector<1x96xf32>
    %26 = vector.broadcast %25 : vector<1x96xf32> to vector<8x96xf32>
    %27 = arith.addf %24, %26 : vector<8x96xf32>
    %28 = vector.extract_strided_slice %27 {offsets = [0, 0], sizes = [8, 32], strides = [1, 1]} : vector<8x96xf32> to vector<8x32xf32>
    %cst_14 = arith.constant 2.500000e-01 : f32
    %29 = vector.broadcast %cst_14 : f32 to vector<8x32xf32>
    %30 = arith.mulf %28, %29 : vector<8x32xf32>
    %31 = vector.shape_cast %30 : vector<8x32xf32> to vector<1x8x32xf32>
    %32 = vector.extract_strided_slice %27 {offsets = [0, 32], sizes = [8, 32], strides = [1, 1]} : vector<8x96xf32> to vector<8x32xf32>
    %33 = vector.shape_cast %32 : vector<8x32xf32> to vector<1x8x32xf32>
    %34 = vector.extract_strided_slice %27 {offsets = [0, 64], sizes = [8, 32], strides = [1, 1]} : vector<8x96xf32> to vector<8x32xf32>
    %35 = vector.shape_cast %34 : vector<8x32xf32> to vector<1x8x32xf32>
    %36 = tpu.iota {dimensions = array<i32: 0>} : vector<8x8xi32>
    %37 = tpu.iota {dimensions = array<i32: 1>} : vector<8x8xi32>
    %38 = arith.cmpi sle, %37, %36 : vector<8x8xi32>
    %cst_15 = arith.constant 0.000000e+00 : f32
    %cst_16 = arith.constant -1.000000e+30 : f32
    %39 = vector.broadcast %cst_15 : f32 to vector<8x8xf32>
    %40 = vector.broadcast %cst_16 : f32 to vector<8x8xf32>
    %41 = arith.select %38, %39, %40 : vector<8x8xi1>, vector<8x8xf32>
    %42 = vector.extract_strided_slice %31 {offsets = [0, 0, 0], sizes = [1, 8, 16], strides = [1, 1, 1]} : vector<1x8x32xf32> to vector<1x8x16xf32>
    %43 = vector.extract_strided_slice %33 {offsets = [0, 0, 0], sizes = [1, 8, 16], strides = [1, 1, 1]} : vector<1x8x32xf32> to vector<1x8x16xf32>
    %44 = vector.extract_strided_slice %35 {offsets = [0, 0, 0], sizes = [1, 8, 16], strides = [1, 1, 1]} : vector<1x8x32xf32> to vector<1x8x16xf32>
    "tpu.trace_start"() <{level = 10 : i32, message = "bqd,bkd->bqk"}> : () -> ()
    %cst_17 = arith.constant dense<0.000000e+00> : vector<1x8x8xf32>
    %45 = tpu.matmul %42, %43, %cst_17 {dimension_numbers = #tpu.dot_dimension_numbers<[2], [2], [1], [1], [0, 0, 0, 1, 1, 1], [0], [0]>} : vector<1x8x16xf32>, vector<1x8x16xf32>, vector<1x8x8xf32> -> vector<1x8x8xf32>
    "tpu.trace_stop"() : () -> ()
    %46 = vector.shape_cast %41 : vector<8x8xf32> to vector<1x8x8xf32>
    %47 = arith.addf %45, %46 : vector<1x8x8xf32>
    %cst_18 = arith.constant dense<0xFF800000> : vector<1x8xf32>
    %48 = vector.multi_reduction <maximumf>, %47, %cst_18 [2] : vector<1x8x8xf32> to vector<1x8xf32>
    %49 = vector.shape_cast %48 : vector<1x8xf32> to vector<1x8x1xf32>
    %50 = vector.broadcast %49 : vector<1x8x1xf32> to vector<1x8x8xf32>
    %51 = arith.subf %47, %50 : vector<1x8x8xf32>
    %52 = math.exp %51 : vector<1x8x8xf32>
    %cst_19 = arith.constant dense<0.000000e+00> : vector<1x8xf32>
    %53 = vector.multi_reduction <add>, %52, %cst_19 [2] : vector<1x8x8xf32> to vector<1x8xf32>
    %54 = vector.shape_cast %53 : vector<1x8xf32> to vector<1x8x1xf32>
    %55 = vector.broadcast %54 : vector<1x8x1xf32> to vector<1x8x8xf32>
    %56 = arith.divf %52, %55 : vector<1x8x8xf32>
    "tpu.trace_start"() <{level = 10 : i32, message = "bqk,bkd->bqd"}> : () -> ()
    %cst_20 = arith.constant dense<0.000000e+00> : vector<1x8x16xf32>
    %57 = tpu.matmul %56, %44, %cst_20 {dimension_numbers = #tpu.dot_dimension_numbers<[2], [1], [1], [2], [0, 0, 0, 1, 1, 2], [0], [0]>} : vector<1x8x8xf32>, vector<1x8x16xf32>, vector<1x8x16xf32> -> vector<1x8x16xf32>
    "tpu.trace_stop"() : () -> ()
    %58 = vector.shape_cast %57 : vector<1x8x16xf32> to vector<8x16xf32>
    %c0_21 = arith.constant 0 : index
    %c0_22 = arith.constant 0 : index
    %59 = vector.load %arg15[%c0_21, %c0_22] : memref<8x32xf32, #tpu.memory_space<vmem>>, vector<8x16xf32>
    tpu.vector_store %arg15[%c0_21, %c0_22], %58 {strides = array<i32>} : memref<8x32xf32, #tpu.memory_space<vmem>>, vector<8x16xf32>,
    %60 = vector.extract_strided_slice %31 {offsets = [0, 0, 16], sizes = [1, 8, 16], strides = [1, 1, 1]} : vector<1x8x32xf32> to vector<1x8x16xf32>
    %61 = vector.extract_strided_slice %33 {offsets = [0, 0, 16], sizes = [1, 8, 16], strides = [1, 1, 1]} : vector<1x8x32xf32> to vector<1x8x16xf32>
    %62 = vector.extract_strided_slice %35 {offsets = [0, 0, 16], sizes = [1, 8, 16], strides = [1, 1, 1]} : vector<1x8x32xf32> to vector<1x8x16xf32>
    "tpu.trace_start"() <{level = 10 : i32, message = "bqd,bkd->bqk"}> : () -> ()
    %cst_23 = arith.constant dense<0.000000e+00> : vector<1x8x8xf32>
    %63 = tpu.matmul %60, %61, %cst_23 {dimension_numbers = #tpu.dot_dimension_numbers<[2], [2], [1], [1], [0, 0, 0, 1, 1, 1], [0], [0]>} : vector<1x8x16xf32>, vector<1x8x16xf32>, vector<1x8x8xf32> -> vector<1x8x8xf32>
    "tpu.trace_stop"() : () -> ()
    %64 = vector.shape_cast %41 : vector<8x8xf32> to vector<1x8x8xf32>
    %65 = arith.addf %63, %64 : vector<1x8x8xf32>
    %cst_24 = arith.constant dense<0xFF800000> : vector<1x8xf32>
    %66 = vector.multi_reduction <maximumf>, %65, %cst_24 [2] : vector<1x8x8xf32> to vector<1x8xf32>
    %67 = vector.shape_cast %66 : vector<1x8xf32> to vector<1x8x1xf32>
    %68 = vector.broadcast %67 : vector<1x8x1xf32> to vector<1x8x8xf32>
    %69 = arith.subf %65, %68 : vector<1x8x8xf32>
    %70 = math.exp %69 : vector<1x8x8xf32>
    %cst_25 = arith.constant dense<0.000000e+00> : vector<1x8xf32>
    %71 = vector.multi_reduction <add>, %70, %cst_25 [2] : vector<1x8x8xf32> to vector<1x8xf32>
    %72 = vector.shape_cast %71 : vector<1x8xf32> to vector<1x8x1xf32>
    %73 = vector.broadcast %72 : vector<1x8x1xf32> to vector<1x8x8xf32>
    %74 = arith.divf %70, %73 : vector<1x8x8xf32>
    "tpu.trace_start"() <{level = 10 : i32, message = "bqk,bkd->bqd"}> : () -> ()
    %cst_26 = arith.constant dense<0.000000e+00> : vector<1x8x16xf32>
    %75 = tpu.matmul %74, %62, %cst_26 {dimension_numbers = #tpu.dot_dimension_numbers<[2], [1], [1], [2], [0, 0, 0, 1, 1, 2], [0], [0]>} : vector<1x8x8xf32>, vector<1x8x16xf32>, vector<1x8x16xf32> -> vector<1x8x16xf32>
    "tpu.trace_stop"() : () -> ()
    %76 = vector.shape_cast %75 : vector<1x8x16xf32> to vector<8x16xf32>
    %c0_27 = arith.constant 0 : index
    %c16 = arith.constant 16 : index
    %77 = vector.load %arg15[%c0_27, %c16] : memref<8x32xf32, #tpu.memory_space<vmem>>, vector<8x16xf32>
    tpu.vector_store %arg15[%c0_27, %c16], %76 {strides = array<i32>} : memref<8x32xf32, #tpu.memory_space<vmem>>, vector<8x16xf32>,
    %c0_28 = arith.constant 0 : index
    %c0_29 = arith.constant 0 : index
    %78 = vector.load %arg15[%c0_28, %c0_29] : memref<8x32xf32, #tpu.memory_space<vmem>>, vector<8x32xf32>
    %c0_30 = arith.constant 0 : index
    %c0_31 = arith.constant 0 : index
    %79 = vector.load %arg6[%c0_30, %c0_31] : memref<32x32xf32, #tpu.memory_space<vmem>>, vector<32x32xf32>
    %cst_32 = arith.constant dense<0.000000e+00> : vector<8x32xf32>
    %80 = tpu.matmul %78, %79, %cst_32 {dimension_numbers = #tpu.dot_dimension_numbers<[1], [0], [0], [1], [0, 0, 1, 1], [], []>} : vector<8x32xf32>, vector<32x32xf32>, vector<8x32xf32> -> vector<8x32xf32>
    %c0_33 = arith.constant 0 : index
    %c0_34 = arith.constant 0 : index
    %81 = vector.load %arg7[%c0_33, %c0_34] : memref<1x32xf32, #tpu.memory_space<vmem>>, vector<1x32xf32>
    %82 = vector.broadcast %81 : vector<1x32xf32> to vector<8x32xf32>
    %83 = arith.addf %80, %82 : vector<8x32xf32>
    %84 = arith.addf %0, %83 : vector<8x32xf32>
    %c0_35 = arith.constant 0 : index
    %c0_36 = arith.constant 0 : index
    %85 = vector.load %arg8[%c0_35, %c0_36] : memref<1x32xf32, #tpu.memory_space<vmem>>, vector<1x32xf32>
    %c0_37 = arith.constant 0 : index
    %c0_38 = arith.constant 0 : index
    %86 = vector.load %arg9[%c0_37, %c0_38] : memref<1x32xf32, #tpu.memory_space<vmem>>, vector<1x32xf32>
    %cst_39 = arith.constant dense<0.000000e+00> : vector<8xf32>
    %87 = vector.multi_reduction <add>, %84, %cst_39 [1] : vector<8x32xf32> to vector<8xf32>
    %88 = vector.shape_cast %87 : vector<8xf32> to vector<8x1xf32>
    %cst_40 = arith.constant 3.200000e+01 : f32
    %89 = vector.broadcast %cst_40 : f32 to vector<8x1xf32>
    %90 = arith.divf %88, %89 : vector<8x1xf32>
    %91 = vector.broadcast %90 : vector<8x1xf32> to vector<8x32xf32>
    %92 = arith.subf %84, %91 : vector<8x32xf32>
    %93 = arith.mulf %92, %92 : vector<8x32xf32>
    %cst_41 = arith.constant dense<0.000000e+00> : vector<8xf32>
    %94 = vector.multi_reduction <add>, %93, %cst_41 [1] : vector<8x32xf32> to vector<8xf32>
    %95 = vector.shape_cast %94 : vector<8xf32> to vector<8x1xf32>
    %cst_42 = arith.constant 3.200000e+01 : f32
    %96 = vector.broadcast %cst_42 : f32 to vector<8x1xf32>
    %97 = arith.divf %95, %96 : vector<8x1xf32>
    %cst_43 = arith.constant 9.99999974E-6 : f32
    %98 = vector.broadcast %cst_43 : f32 to vector<8x1xf32>
    %99 = arith.addf %97, %98 : vector<8x1xf32>
    %100 = math.rsqrt %99 : vector<8x1xf32>
    %101 = vector.broadcast %100 : vector<8x1xf32> to vector<8x32xf32>
    %102 = arith.mulf %92, %101 : vector<8x32xf32>
    %103 = vector.broadcast %85 : vector<1x32xf32> to vector<8x32xf32>
    %104 = arith.mulf %102, %103 : vector<8x32xf32>
    %105 = vector.broadcast %86 : vector<1x32xf32> to vector<8x32xf32>
    %106 = arith.addf %104, %105 : vector<8x32xf32>
    %c0_44 = arith.constant 0 : index
    %c0_45 = arith.constant 0 : index
    %107 = vector.load %arg10[%c0_44, %c0_45] : memref<32x128xf32, #tpu.memory_space<vmem>>, vector<32x128xf32>
    %cst_46 = arith.constant dense<0.000000e+00> : vector<8x128xf32>
    %108 = tpu.matmul %106, %107, %cst_46 {dimension_numbers = #tpu.dot_dimension_numbers<[1], [0], [0], [1], [0, 0, 1, 1], [], []>} : vector<8x32xf32>, vector<32x128xf32>, vector<8x128xf32> -> vector<8x128xf32>
    %c0_47 = arith.constant 0 : index
    %c0_48 = arith.constant 0 : index
    %109 = vector.load %arg11[%c0_47, %c0_48] : memref<1x128xf32, #tpu.memory_space<vmem>>, vector<1x128xf32>
    %110 = vector.broadcast %109 : vector<1x128xf32> to vector<8x128xf32>
    %111 = arith.addf %108, %110 : vector<8x128xf32>
    %cst_49 = arith.constant 5.000000e-01 : f32
    %112 = vector.broadcast %cst_49 : f32 to vector<8x128xf32>
    %113 = arith.mulf %112, %111 : vector<8x128xf32>
    %cst_50 = arith.constant 0.707106769 : f32
    %114 = vector.broadcast %cst_50 : f32 to vector<8x128xf32>
    %115 = arith.mulf %111, %114 : vector<8x128xf32>
    %116 = math.absf %115 : vector<8x128xf32>
    %cst_51 = arith.constant 0.327591091 : f32
    %117 = vector.broadcast %cst_51 : f32 to vector<8x128xf32>
    %118 = arith.mulf %117, %116 : vector<8x128xf32>
    %cst_52 = arith.constant 1.000000e+00 : f32
    %119 = vector.broadcast %cst_52 : f32 to vector<8x128xf32>
    %120 = arith.addf %119, %118 : vector<8x128xf32>
    %cst_53 = arith.constant 1.000000e+00 : f32
    %121 = vector.broadcast %cst_53 : f32 to vector<8x128xf32>
    %122 = arith.divf %121, %120 : vector<8x128xf32>
    %cst_54 = arith.constant 1.06140542 : f32
    %123 = vector.broadcast %cst_54 : f32 to vector<8x128xf32>
    %124 = arith.mulf %123, %122 : vector<8x128xf32>
    %cst_55 = arith.constant -1.45315206 : f32
    %125 = vector.broadcast %cst_55 : f32 to vector<8x128xf32>
    %126 = arith.addf %124, %125 : vector<8x128xf32>
    %127 = arith.mulf %126, %122 : vector<8x128xf32>
    %cst_56 = arith.constant 1.42141378 : f32
    %128 = vector.broadcast %cst_56 : f32 to vector<8x128xf32>
    %129 = arith.addf %127, %128 : vector<8x128xf32>
    %130 = arith.mulf %129, %122 : vector<8x128xf32>
    %cst_57 = arith.constant -0.284496725 : f32
    %131 = vector.broadcast %cst_57 : f32 to vector<8x128xf32>
    %132 = arith.addf %130, %131 : vector<8x128xf32>
    %133 = arith.mulf %132, %122 : vector<8x128xf32>
    %cst_58 = arith.constant 0.254829586 : f32
    %134 = vector.broadcast %cst_58 : f32 to vector<8x128xf32>
    %135 = arith.addf %133, %134 : vector<8x128xf32>
    %136 = arith.mulf %135, %122 : vector<8x128xf32>
    %cst_59 = arith.constant 0.000000e+00 : f32
    %137 = vector.broadcast %cst_59 : f32 to vector<8x128xf32>
    %138 = arith.subf %137, %116 : vector<8x128xf32>
    %139 = arith.mulf %138, %116 : vector<8x128xf32>
    %140 = math.exp %139 : vector<8x128xf32>
    %141 = arith.mulf %136, %140 : vector<8x128xf32>
    %cst_60 = arith.constant 1.000000e+00 : f32
    %142 = vector.broadcast %cst_60 : f32 to vector<8x128xf32>
    %143 = arith.subf %142, %141 : vector<8x128xf32>
    %cst_61 = arith.constant 0.000000e+00 : f32
    %144 = vector.broadcast %cst_61 : f32 to vector<8x128xf32>
    %145 = arith.cmpf oge, %115, %144 : vector<8x128xf32>
    %cst_62 = arith.constant 0.000000e+00 : f32
    %146 = vector.broadcast %cst_62 : f32 to vector<8x128xf32>
    %147 = arith.subf %146, %143 : vector<8x128xf32>
    %148 = arith.select %145, %143, %147 : vector<8x128xi1>, vector<8x128xf32>
    %cst_63 = arith.constant 1.000000e+00 : f32
    %149 = vector.broadcast %cst_63 : f32 to vector<8x128xf32>
    %150 = arith.addf %149, %148 : vector<8x128xf32>
    %151 = arith.mulf %113, %150 : vector<8x128xf32>
    %c0_64 = arith.constant 0 : index
    %c0_65 = arith.constant 0 : index
    %152 = vector.load %arg12[%c0_64, %c0_65] : memref<128x32xf32, #tpu.memory_space<vmem>>, vector<128x32xf32>
    %cst_66 = arith.constant dense<0.000000e+00> : vector<8x32xf32>
    %153 = tpu.matmul %151, %152, %cst_66 {dimension_numbers = #tpu.dot_dimension_numbers<[1], [0], [0], [1], [0, 0, 1, 1], [], []>} : vector<8x128xf32>, vector<128x32xf32>, vector<8x32xf32> -> vector<8x32xf32>
    %c0_67 = arith.constant 0 : index
    %c0_68 = arith.constant 0 : index
    %154 = vector.load %arg13[%c0_67, %c0_68] : memref<1x32xf32, #tpu.memory_space<vmem>>, vector<1x32xf32>
    %155 = vector.broadcast %154 : vector<1x32xf32> to vector<8x32xf32>
    %156 = arith.addf %153, %155 : vector<8x32xf32>
    %157 = arith.addf %84, %156 : vector<8x32xf32>
    %c0_69 = arith.constant 0 : index
    %c0_70 = arith.constant 0 : index
    %158 = vector.load %arg14[%c0_69, %c0_70] : memref<8x32xf32, #tpu.memory_space<vmem>>, vector<8x32xf32>
    tpu.vector_store %arg14[%c0_69, %c0_70], %157 {strides = array<i32>} : memref<8x32xf32, #tpu.memory_space<vmem>>, vector<8x32xf32>,
    return
  }
  func.func @transform_0(%arg0: i32) -> (i32, i32) {
    %c0_i32 = arith.constant 0 : i32
    %c0_i32_0 = arith.constant 0 : i32
    return %arg0, %c0_i32 : i32, i32
  }
  func.func @transform_1(%arg0: i32) -> (i32, i32) {
    %c0_i32 = arith.constant 0 : i32
    %c0_i32_0 = arith.constant 0 : i32
    %c0_i32_1 = arith.constant 0 : i32
    return %c0_i32, %c0_i32_0 : i32, i32
  }
  func.func @transform_2(%arg0: i32) -> (i32, i32) {
    %c0_i32 = arith.constant 0 : i32
    %c0_i32_0 = arith.constant 0 : i32
    %c0_i32_1 = arith.constant 0 : i32
    return %c0_i32, %c0_i32_0 : i32, i32
  }
  func.func @transform_3(%arg0: i32) -> (i32, i32) {
    %c0_i32 = arith.constant 0 : i32
    %c0_i32_0 = arith.constant 0 : i32
    %c0_i32_1 = arith.constant 0 : i32
    return %c0_i32, %c0_i32_0 : i32, i32
  }
  func.func @transform_4(%arg0: i32) -> (i32, i32) {
    %c0_i32 = arith.constant 0 : i32
    %c0_i32_0 = arith.constant 0 : i32
    %c0_i32_1 = arith.constant 0 : i32
    return %c0_i32, %c0_i32_0 : i32, i32
  }
  func.func @transform_5(%arg0: i32) -> (i32, i32) {
    %c0_i32 = arith.constant 0 : i32
    %c0_i32_0 = arith.constant 0 : i32
    %c0_i32_1 = arith.constant 0 : i32
    return %c0_i32, %c0_i32_0 : i32, i32
  }
  func.func @transform_6(%arg0: i32) -> (i32, i32) {
    %c0_i32 = arith.constant 0 : i32
    %c0_i32_0 = arith.constant 0 : i32
    %c0_i32_1 = arith.constant 0 : i32
    return %c0_i32, %c0_i32_0 : i32, i32
  }
  func.func @transform_7(%arg0: i32) -> (i32, i32) {
    %c0_i32 = arith.constant 0 : i32
    %c0_i32_0 = arith.constant 0 : i32
    %c0_i32_1 = arith.constant 0 : i32
    return %c0_i32, %c0_i32_0 : i32, i32
  }
  func.func @transform_8(%arg0: i32) -> (i32, i32) {
    %c0_i32 = arith.constant 0 : i32
    %c0_i32_0 = arith.constant 0 : i32
    %c0_i32_1 = arith.constant 0 : i32
    return %c0_i32, %c0_i32_0 : i32, i32
  }
  func.func @transform_9(%arg0: i32) -> (i32, i32) {
    %c0_i32 = arith.constant 0 : i32
    %c0_i32_0 = arith.constant 0 : i32
    %c0_i32_1 = arith.constant 0 : i32
    return %c0_i32, %c0_i32_0 : i32, i32
  }
  func.func @transform_10(%arg0: i32) -> (i32, i32) {
    %c0_i32 = arith.constant 0 : i32
    %c0_i32_0 = arith.constant 0 : i32
    %c0_i32_1 = arith.constant 0 : i32
    return %c0_i32, %c0_i32_0 : i32, i32
  }
  func.func @transform_11(%arg0: i32) -> (i32, i32) {
    %c0_i32 = arith.constant 0 : i32
    %c0_i32_0 = arith.constant 0 : i32
    %c0_i32_1 = arith.constant 0 : i32
    return %c0_i32, %c0_i32_0 : i32, i32
  }
  func.func @transform_12(%arg0: i32) -> (i32, i32) {
    %c0_i32 = arith.constant 0 : i32
    %c0_i32_0 = arith.constant 0 : i32
    %c0_i32_1 = arith.constant 0 : i32
    return %c0_i32, %c0_i32_0 : i32, i32
  }
  func.func @transform_13(%arg0: i32) -> (i32, i32) {
    %c0_i32 = arith.constant 0 : i32
    %c0_i32_0 = arith.constant 0 : i32
    return %arg0, %c0_i32 : i32, i32
  }
}

</mosaic_0001>

<llo_original>
// kernel: tpu_custom_call.1
$region0: #{tpu_custom_call.1}
  #allocation0 [shape = 'u32[]', space=smem, size = 0x4, offset = 0x4, fixed_abs, tag = 'smem constant byte address 0x4 - core index']
  #allocation1 [shape = 'u32[144,128]{1,0:T(1,128)}', space=vmem, size = 0x12000, scoped, tag = 'internal scratch']
  #allocation2 [shape = 'f32[8,32]{1,0:T(8,128)}', space=vmem, size = 0x1000, scoped, tag = 'scratch operand']
  %s0 = inlined_call_operand.vmem [shape: f32[16,32], index: 0, kind: input, shape index: {}]
  %s1 = inlined_call_operand.vmem [shape: f32[1,32], index: 1, kind: input, shape index: {}]
  %s2 = inlined_call_operand.vmem [shape: f32[1,32], index: 2, kind: input, shape index: {}]
  %s3 = inlined_call_operand.vmem [shape: f32[32,96], index: 3, kind: input, shape index: {}]
  %s4 = inlined_call_operand.vmem [shape: f32[1,96], index: 4, kind: input, shape index: {}]
  %s5 = inlined_call_operand.vmem [shape: f32[32,32], index: 5, kind: input, shape index: {}]
  %s6 = inlined_call_operand.vmem [shape: f32[1,32], index: 6, kind: input, shape index: {}]
  %s7 = inlined_call_operand.vmem [shape: f32[1,32], index: 7, kind: input, shape index: {}]
  %s8 = inlined_call_operand.vmem [shape: f32[1,32], index: 8, kind: input, shape index: {}]
  %s9 = inlined_call_operand.vmem [shape: f32[32,128], index: 9, kind: input, shape index: {}]
  %s10 = inlined_call_operand.vmem [shape: f32[1,128], index: 10, kind: input, shape index: {}]
  %s11 = inlined_call_operand.vmem [shape: f32[128,32], index: 11, kind: input, shape index: {}]
  %s12 = inlined_call_operand.vmem [shape: f32[1,32], index: 12, kind: input, shape index: {}]
  %s13 = inlined_call_operand.hbm [shape: f32[16,32], index: 13, kind: output, shape index: {}]
  %s14 = sld [smem:[#allocation0]]
  $region85: #{tpu_custom_call.1} parent=0
    _
  %s16 = ssub.s32 1, %s14
  %s17 = scalar_select 0, %s16, %s14
  $region1: #{tpu_custom_call.1} parent=0
    #allocation3 [shape = 'u8[8192]{0}', space=vmem, size = 0x2000, scoped, tag = 'output window, operand 0']
    #allocation4 [shape = 's32[2]{0}', space=sflag, size = 0x8, scoped, tag = 'scoped memory for tpu_custom_call.1']
    %18 = vsyncpa [#allocation4], 0
    %s19 = scalar_lea.sflag [#allocation4], 1
    %20 = vsyncpa %s19, 0
    loop: start=0, step=1, limit=4
    $region2: #{tpu_custom_call.1} parent=1 // loop_pre_header
      _
    $region3: #{tpu_custom_call.1} parent=1 // loop_header
      %s22 = sphi 0, %s26
      %p23 = scmp.ge.s32.totalorder %s22, 4
      %s32 = sphi 0, %s34
      %s35 = sphi 0, %s32
      %s36 = sphi 0, %s35
      %s52 = sphi 0, %s36
      %s56 = sphi 0, %s56
      %s58 = sphi 0, %s56
      %s59 = sphi 0, %s58
      %s73 = sphi 0, %s59
      %s77 = sphi 0, %s77
      %s79 = sphi 0, %s77
      %s80 = sphi 0, %s79
      %s94 = sphi 0, %s80
      %s98 = sphi 0, %s98
      %s100 = sphi 0, %s98
      %s101 = sphi 0, %s100
      %s115 = sphi 0, %s101
      %s119 = sphi 0, %s119
      %s121 = sphi 0, %s119
      %s122 = sphi 0, %s121
      %s136 = sphi 0, %s122
      %s140 = sphi 0, %s140
      %s142 = sphi 0, %s140
      %s143 = sphi 0, %s142
      %s157 = sphi 0, %s143
      %s161 = sphi 0, %s161
      %s163 = sphi 0, %s161
      %s164 = sphi 0, %s163
      %s178 = sphi 0, %s164
      %s182 = sphi 0, %s182
      %s184 = sphi 0, %s182
      %s185 = sphi 0, %s184
      %s199 = sphi 0, %s185
      %s203 = sphi 0, %s203
      %s205 = sphi 0, %s203
      %s206 = sphi 0, %s205
      %s220 = sphi 0, %s206
      %s224 = sphi 0, %s224
      %s226 = sphi 0, %s224
      %s227 = sphi 0, %s226
      %s241 = sphi 0, %s227
      %s245 = sphi 0, %s245
      %s247 = sphi 0, %s245
      %s248 = sphi 0, %s247
      %s262 = sphi 0, %s248
      %s266 = sphi 0, %s266
      %s268 = sphi 0, %s266
      %s269 = sphi 0, %s268
      %s283 = sphi 0, %s269
      %s287 = sphi 0, %s287
      %s289 = sphi 0, %s287
      %s290 = sphi 0, %s289
      %s304 = sphi 0, %s290
      %s310 = sphi 0, %s312
      %s313 = sphi 0, %s310
      %s314 = sphi 0, %s313
      %s330 = sphi 0, %s314
    $region4: #{tpu_custom_call.1} parent=1 // loop_header_branch
      %25 = sbr.rel (%p23) target = $region8
    $region5: #{tpu_custom_call.1} parent=1 // loop_body
      %s27 = ssub.s32 %s22, 1
      %s28 = ssub.s32 %s22, 2
      %s29 = sadd.s32 %s22, 1
      %s30 = ssub.s32 %s22, %s29
      %p31 = scmp.eq.s32.totalorder %s30, 0
      %s33 = sadd.s32 %s32, 1
      %s34 = scalar_select %p31, %s32, %s33
      %p37 = pneg %p31
      %p38 = scmp.eq.s32.totalorder %s22, 1
      %p39 = por %p37, %p38
      %p40 = scmp.ne.s32.totalorder %s32, %s35
      %p41 = scmp.eq.s32.totalorder %s22, 0
      %p42 = por %p40, %p41
      %p43 = scmp.ne.s32.totalorder %s32, %s35
      %p44 = scmp.eq.s32.totalorder %s27, 1
      %p45 = por %p43, %p44
      %p46 = scmp.ne.s32.totalorder %s35, %s36
      %p47 = scmp.eq.s32.totalorder %s27, 0
      %p48 = por %p46, %p47
      %p49 = scmp.ne.s32.totalorder %s35, %s36
      %p50 = scmp.eq.s32.totalorder %s28, 1
      %p51 = por %p49, %p50
      %p53 = scmp.ne.s32.totalorder %s36, %s52
      %p54 = scmp.eq.s32.totalorder %s28, 0
      %p55 = por %p53, %p54
      %s57 = sadd.s32 %s56, 1
      %p60 = scmp.eq.s32.totalorder %s22, 1
      %p61 = scmp.ne.s32.totalorder %s56, %s58
      %p62 = scmp.eq.s32.totalorder %s22, 0
      %p63 = por %p61, %p62
      %p64 = scmp.ne.s32.totalorder %s56, %s58
      %p65 = scmp.eq.s32.totalorder %s27, 1
      %p66 = por %p64, %p65
      %p67 = scmp.ne.s32.totalorder %s58, %s59
      %p68 = scmp.eq.s32.totalorder %s27, 0
      %p69 = por %p67, %p68
      %p70 = scmp.ne.s32.totalorder %s58, %s59
      %p71 = scmp.eq.s32.totalorder %s28, 1
      %p72 = por %p70, %p71
      %p74 = scmp.ne.s32.totalorder %s59, %s73
      %p75 = scmp.eq.s32.totalorder %s28, 0
      %p76 = por %p74, %p75
      %s78 = sadd.s32 %s77, 1
      %p81 = scmp.eq.s32.totalorder %s22, 1
      %p82 = scmp.ne.s32.totalorder %s77, %s79
      %p83 = scmp.eq.s32.totalorder %s22, 0
      %p84 = por %p82, %p83
      %p85 = scmp.ne.s32.totalorder %s77, %s79
      %p86 = scmp.eq.s32.totalorder %s27, 1
      %p87 = por %p85, %p86
      %p88 = scmp.ne.s32.totalorder %s79, %s80
      %p89 = scmp.eq.s32.totalorder %s27, 0
      %p90 = por %p88, %p89
      %p91 = scmp.ne.s32.totalorder %s79, %s80
      %p92 = scmp.eq.s32.totalorder %s28, 1
      %p93 = por %p91, %p92
      %p95 = scmp.ne.s32.totalorder %s80, %s94
      %p96 = scmp.eq.s32.totalorder %s28, 0
      %p97 = por %p95, %p96
      %s99 = sadd.s32 %s98, 1
      %p102 = scmp.eq.s32.totalorder %s22, 1
      %p103 = scmp.ne.s32.totalorder %s98, %s100
      %p104 = scmp.eq.s32.totalorder %s22, 0
      %p105 = por %p103, %p104
      %p106 = scmp.ne.s32.totalorder %s98, %s100
      %p107 = scmp.eq.s32.totalorder %s27, 1
      %p108 = por %p106, %p107
      %p109 = scmp.ne.s32.totalorder %s100, %s101
      %p110 = scmp.eq.s32.totalorder %s27, 0
      %p111 = por %p109, %p110
      %p112 = scmp.ne.s32.totalorder %s100, %s101
      %p113 = scmp.eq.s32.totalorder %s28, 1
      %p114 = por %p112, %p113
      %p116 = scmp.ne.s32.totalorder %s101, %s115
      %p117 = scmp.eq.s32.totalorder %s28, 0
      %p118 = por %p116, %p117
      %s120 = sadd.s32 %s119, 1
      %p123 = scmp.eq.s32.totalorder %s22, 1
      %p124 = scmp.ne.s32.totalorder %s119, %s121
      %p125 = scmp.eq.s32.totalorder %s22, 0
      %p126 = por %p124, %p125
      %p127 = scmp.ne.s32.totalorder %s119, %s121
      %p128 = scmp.eq.s32.totalorder %s27, 1
      %p129 = por %p127, %p128
      %p130 = scmp.ne.s32.totalorder %s121, %s122
      %p131 = scmp.eq.s32.totalorder %s27, 0
      %p132 = por %p130, %p131
      %p133 = scmp.ne.s32.totalorder %s121, %s122
      %p134 = scmp.eq.s32.totalorder %s28, 1
      %p135 = por %p133, %p134
      %p137 = scmp.ne.s32.totalorder %s122, %s136
      %p138 = scmp.eq.s32.totalorder %s28, 0
      %p139 = por %p137, %p138
      %s141 = sadd.s32 %s140, 1
      %p144 = scmp.eq.s32.totalorder %s22, 1
      %p145 = scmp.ne.s32.totalorder %s140, %s142
      %p146 = scmp.eq.s32.totalorder %s22, 0
      %p147 = por %p145, %p146
      %p148 = scmp.ne.s32.totalorder %s140, %s142
      %p149 = scmp.eq.s32.totalorder %s27, 1
      %p150 = por %p148, %p149
      %p151 = scmp.ne.s32.totalorder %s142, %s143
      %p152 = scmp.eq.s32.totalorder %s27, 0
      %p153 = por %p151, %p152
      %p154 = scmp.ne.s32.totalorder %s142, %s143
      %p155 = scmp.eq.s32.totalorder %s28, 1
      %p156 = por %p154, %p155
      %p158 = scmp.ne.s32.totalorder %s143, %s157
      %p159 = scmp.eq.s32.totalorder %s28, 0
      %p160 = por %p158, %p159
      %s162 = sadd.s32 %s161, 1
      %p165 = scmp.eq.s32.totalorder %s22, 1
      %p166 = scmp.ne.s32.totalorder %s161, %s163
      %p167 = scmp.eq.s32.totalorder %s22, 0
      %p168 = por %p166, %p167
      %p169 = scmp.ne.s32.totalorder %s161, %s163
      %p170 = scmp.eq.s32.totalorder %s27, 1
      %p171 = por %p169, %p170
      %p172 = scmp.ne.s32.totalorder %s163, %s164
      %p173 = scmp.eq.s32.totalorder %s27, 0
      %p174 = por %p172, %p173
      %p175 = scmp.ne.s32.totalorder %s163, %s164
      %p176 = scmp.eq.s32.totalorder %s28, 1
      %p177 = por %p175, %p176
      %p179 = scmp.ne.s32.totalorder %s164, %s178
      %p180 = scmp.eq.s32.totalorder %s28, 0
      %p181 = por %p179, %p180
      %s183 = sadd.s32 %s182, 1
      %p186 = scmp.eq.s32.totalorder %s22, 1
      %p187 = scmp.ne.s32.totalorder %s182, %s184
      %p188 = scmp.eq.s32.totalorder %s22, 0
      %p189 = por %p187, %p188
      %p190 = scmp.ne.s32.totalorder %s182, %s184
      %p191 = scmp.eq.s32.totalorder %s27, 1
      %p192 = por %p190, %p191
      %p193 = scmp.ne.s32.totalorder %s184, %s185
      %p194 = scmp.eq.s32.totalorder %s27, 0
      %p195 = por %p193, %p194
      %p196 = scmp.ne.s32.totalorder %s184, %s185
      %p197 = scmp.eq.s32.totalorder %s28, 1
      %p198 = por %p196, %p197
      %p200 = scmp.ne.s32.totalorder %s185, %s199
      %p201 = scmp.eq.s32.totalorder %s28, 0
      %p202 = por %p200, %p201
      %s204 = sadd.s32 %s203, 1
      %p207 = scmp.eq.s32.totalorder %s22, 1
      %p208 = scmp.ne.s32.totalorder %s203, %s205
      %p209 = scmp.eq.s32.totalorder %s22, 0
      %p210 = por %p208, %p209
      %p211 = scmp.ne.s32.totalorder %s203, %s205
      %p212 = scmp.eq.s32.totalorder %s27, 1
      %p213 = por %p211, %p212
      %p214 = scmp.ne.s32.totalorder %s205, %s206
      %p215 = scmp.eq.s32.totalorder %s27, 0
      %p216 = por %p214, %p215
      %p217 = scmp.ne.s32.totalorder %s205, %s206
      %p218 = scmp.eq.s32.totalorder %s28, 1
      %p219 = por %p217, %p218
      %p221 = scmp.ne.s32.totalorder %s206, %s220
      %p222 = scmp.eq.s32.totalorder %s28, 0
      %p223 = por %p221, %p222
      %s225 = sadd.s32 %s224, 1
      %p228 = scmp.eq.s32.totalorder %s22, 1
      %p229 = scmp.ne.s32.totalorder %s224, %s226
      %p230 = scmp.eq.s32.totalorder %s22, 0
      %p231 = por %p229, %p230
      %p232 = scmp.ne.s32.totalorder %s224, %s226
      %p233 = scmp.eq.s32.totalorder %s27, 1
      %p234 = por %p232, %p233
      %p235 = scmp.ne.s32.totalorder %s226, %s227
      %p236 = scmp.eq.s32.totalorder %s27, 0
      %p237 = por %p235, %p236
      %p238 = scmp.ne.s32.totalorder %s226, %s227
      %p239 = scmp.eq.s32.totalorder %s28, 1
      %p240 = por %p238, %p239
      %p242 = scmp.ne.s32.totalorder %s227, %s241
      %p243 = scmp.eq.s32.totalorder %s28, 0
      %p244 = por %p242, %p243
      %s246 = sadd.s32 %s245, 1
      %p249 = scmp.eq.s32.totalorder %s22, 1
      %p250 = scmp.ne.s32.totalorder %s245, %s247
      %p251 = scmp.eq.s32.totalorder %s22, 0
      %p252 = por %p250, %p251
      %p253 = scmp.ne.s32.totalorder %s245, %s247
      %p254 = scmp.eq.s32.totalorder %s27, 1
      %p255 = por %p253, %p254
      %p256 = scmp.ne.s32.totalorder %s247, %s248
      %p257 = scmp.eq.s32.totalorder %s27, 0
      %p258 = por %p256, %p257
      %p259 = scmp.ne.s32.totalorder %s247, %s248
      %p260 = scmp.eq.s32.totalorder %s28, 1
      %p261 = por %p259, %p260
      %p263 = scmp.ne.s32.totalorder %s248, %s262
      %p264 = scmp.eq.s32.totalorder %s28, 0
      %p265 = por %p263, %p264
      %s267 = sadd.s32 %s266, 1
      %p270 = scmp.eq.s32.totalorder %s22, 1
      %p271 = scmp.ne.s32.totalorder %s266, %s268
      %p272 = scmp.eq.s32.totalorder %s22, 0
      %p273 = por %p271, %p272
      %p274 = scmp.ne.s32.totalorder %s266, %s268
      %p275 = scmp.eq.s32.totalorder %s27, 1
      %p276 = por %p274, %p275
      %p277 = scmp.ne.s32.totalorder %s268, %s269
      %p278 = scmp.eq.s32.totalorder %s27, 0
      %p279 = por %p277, %p278
      %p280 = scmp.ne.s32.totalorder %s268, %s269
      %p281 = scmp.eq.s32.totalorder %s28, 1
      %p282 = por %p280, %p281
      %p284 = scmp.ne.s32.totalorder %s269, %s283
      %p285 = scmp.eq.s32.totalorder %s28, 0
      %p286 = por %p284, %p285
      %s288 = sadd.s32 %s287, 1
      %p291 = scmp.eq.s32.totalorder %s22, 1
      %p292 = scmp.ne.s32.totalorder %s287, %s289
      %p293 = scmp.eq.s32.totalorder %s22, 0
      %p294 = por %p292, %p293
      %p295 = scmp.ne.s32.totalorder %s287, %s289
      %p296 = scmp.eq.s32.totalorder %s27, 1
      %p297 = por %p295, %p296
      %p298 = scmp.ne.s32.totalorder %s289, %s290
      %p299 = scmp.eq.s32.totalorder %s27, 0
      %p300 = por %p298, %p299
      %p301 = scmp.ne.s32.totalorder %s289, %s290
      %p302 = scmp.eq.s32.totalorder %s28, 1
      %p303 = por %p301, %p302
      %p305 = scmp.ne.s32.totalorder %s290, %s304
      %p306 = scmp.eq.s32.totalorder %s28, 0
      %p307 = por %p305, %p306
      %s308 = ssub.s32 %s22, %s29
      %p309 = scmp.eq.s32.totalorder %s308, 0
      %s311 = sadd.s32 %s310, 1
      %s312 = scalar_select %p309, %s310, %s311
      %p315 = pneg %p309
      %p316 = scmp.eq.s32.totalorder %s22, 1
      %p317 = por %p315, %p316
      %p318 = scmp.ne.s32.totalorder %s310, %s313
      %p319 = scmp.eq.s32.totalorder %s22, 0
      %p320 = por %p318, %p319
      %p321 = scmp.ne.s32.totalorder %s310, %s313
      %p322 = scmp.eq.s32.totalorder %s27, 1
      %p323 = por %p321, %p322
      %p324 = scmp.ne.s32.totalorder %s313, %s314
      %p325 = scmp.eq.s32.totalorder %s27, 0
      %p326 = por %p324, %p325
      %p327 = scmp.ne.s32.totalorder %s313, %s314
      %p328 = scmp.eq.s32.totalorder %s28, 1
      %p329 = por %p327, %p328
      %p331 = scmp.ne.s32.totalorder %s314, %s330
      %p332 = scmp.eq.s32.totalorder %s28, 0
      %p333 = por %p331, %p332
      %p334 = scmp.le.s32.totalorder 1, %s22
      %p335 = scmp.lt.s32.totalorder %s22, 3
      %p336 = pnand %p334, %p335
      %p337 = pneg %p336
      // Predicated region
      $region9: #{tpu_custom_call.1} parent=5 // pred_check
        _
      $region10: #{tpu_custom_call.1} parent=5 // pred_check_branch
        %339 = sbr.rel (%p336) target = $region12
      $region11: #{tpu_custom_call.1} parent=5 // pred_region
        %s340 = ssub.s32 %s22, 1
        // Predicated region
        $region13: #{tpu_custom_call.1} parent=11 // pred_check
          %p341 = pneg %p69
        $region14: #{tpu_custom_call.1} parent=11 // pred_check_branch
          %343 = sbr.rel (%p341) target = $region16
        $region15: #{tpu_custom_call.1} parent=11 // pred_region
          _
        $region16: #{tpu_custom_call.1} parent=11 // pred_fallthru
          _
        // Predicated region
        $region17: #{tpu_custom_call.1} parent=11 // pred_check
          %p344 = pneg %p90
        $region18: #{tpu_custom_call.1} parent=11 // pred_check_branch
          %346 = sbr.rel (%p344) target = $region20
        $region19: #{tpu_custom_call.1} parent=11 // pred_region
          _
        $region20: #{tpu_custom_call.1} parent=11 // pred_fallthru
          _
        // Predicated region
        $region21: #{tpu_custom_call.1} parent=11 // pred_check
          %p347 = pneg %p111
        $region22: #{tpu_custom_call.1} parent=11 // pred_check_branch
          %349 = sbr.rel (%p347) target = $region24
        $region23: #{tpu_custom_call.1} parent=11 // pred_region
          _
        $region24: #{tpu_custom_call.1} parent=11 // pred_fallthru
          _
        // Predicated region
        $region25: #{tpu_custom_call.1} parent=11 // pred_check
          %p350 = pneg %p132
        $region26: #{tpu_custom_call.1} parent=11 // pred_check_branch
          %352 = sbr.rel (%p350) target = $region28
        $region27: #{tpu_custom_call.1} parent=11 // pred_region
          _
        $region28: #{tpu_custom_call.1} parent=11 // pred_fallthru
          _
        // Predicated region
        $region29: #{tpu_custom_call.1} parent=11 // pred_check
          %p353 = pneg %p153
        $region30: #{tpu_custom_call.1} parent=11 // pred_check_branch
          %355 = sbr.rel (%p353) target = $region32
        $region31: #{tpu_custom_call.1} parent=11 // pred_region
          _
        $region32: #{tpu_custom_call.1} parent=11 // pred_fallthru
          _
        // Predicated region
        $region33: #{tpu_custom_call.1} parent=11 // pred_check
          %p356 = pneg %p174
        $region34: #{tpu_custom_call.1} parent=11 // pred_check_branch
          %358 = sbr.rel (%p356) target = $region36
        $region35: #{tpu_custom_call.1} parent=11 // pred_region
          _
        $region36: #{tpu_custom_call.1} parent=11 // pred_fallthru
          _
        // Predicated region
        $region37: #{tpu_custom_call.1} parent=11 // pred_check
          %p359 = pneg %p195
        $region38: #{tpu_custom_call.1} parent=11 // pred_check_branch
          %361 = sbr.rel (%p359) target = $region40
        $region39: #{tpu_custom_call.1} parent=11 // pred_region
          _
        $region40: #{tpu_custom_call.1} parent=11 // pred_fallthru
          _
        // Predicated region
        $region41: #{tpu_custom_call.1} parent=11 // pred_check
          %p362 = pneg %p216
        $region42: #{tpu_custom_call.1} parent=11 // pred_check_branch
          %364 = sbr.rel (%p362) target = $region44
        $region43: #{tpu_custom_call.1} parent=11 // pred_region
          _
        $region44: #{tpu_custom_call.1} parent=11 // pred_fallthru
          _
        // Predicated region
        $region45: #{tpu_custom_call.1} parent=11 // pred_check
          %p365 = pneg %p237
        $region46: #{tpu_custom_call.1} parent=11 // pred_check_branch
          %367 = sbr.rel (%p365) target = $region48
        $region47: #{tpu_custom_call.1} parent=11 // pred_region
          _
        $region48: #{tpu_custom_call.1} parent=11 // pred_fallthru
          _
        // Predicated region
        $region49: #{tpu_custom_call.1} parent=11 // pred_check
          %p368 = pneg %p258
        $region50: #{tpu_custom_call.1} parent=11 // pred_check_branch
          %370 = sbr.rel (%p368) target = $region52
        $region51: #{tpu_custom_call.1} parent=11 // pred_region
          _
        $region52: #{tpu_custom_call.1} parent=11 // pred_fallthru
          _
        // Predicated region
        $region53: #{tpu_custom_call.1} parent=11 // pred_check
          %p371 = pneg %p279
        $region54: #{tpu_custom_call.1} parent=11 // pred_check_branch
          %373 = sbr.rel (%p371) target = $region56
        $region55: #{tpu_custom_call.1} parent=11 // pred_region
          _
        $region56: #{tpu_custom_call.1} parent=11 // pred_fallthru
          _
        // Predicated region
        $region57: #{tpu_custom_call.1} parent=11 // pred_check
          %p374 = pneg %p300
        $region58: #{tpu_custom_call.1} parent=11 // pred_check_branch
          %376 = sbr.rel (%p374) target = $region60
        $region59: #{tpu_custom_call.1} parent=11 // pred_region
          _
        $region60: #{tpu_custom_call.1} parent=11 // pred_fallthru
          _
      $region12: #{tpu_custom_call.1} parent=5 // pred_fallthru
        _
      %p377 = scmp.lt.s32.totalorder %s22, 2
      // Predicated region
      $region61: #{tpu_custom_call.1} parent=5 // pred_check
        %p378 = pneg %p377
      $region62: #{tpu_custom_call.1} parent=5 // pred_check_branch
        %380 = sbr.rel (%p378) target = $region64
      $region63: #{tpu_custom_call.1} parent=5 // pred_region
        // Predicated region
        $region65: #{tpu_custom_call.1} parent=63 // pred_check
          %p381 = pneg %p42
        $region66: #{tpu_custom_call.1} parent=63 // pred_check_branch
          %383 = sbr.rel (%p381) target = $region68
        $region67: #{tpu_custom_call.1} parent=63 // pred_region
          %p384 = scmp.lt.s32.totalorder %s22, 1
          %s385 = scalar_select %p384, %s22, 1
          %s386 = smul.addr %s385, 8
          %s387 = scalar_lea.vmem %s0, %s386
        $region68: #{tpu_custom_call.1} parent=63 // pred_fallthru
          _
      $region64: #{tpu_custom_call.1} parent=5 // pred_fallthru
        _
      %p388 = scmp.le.s32.totalorder 1, %s22
      %p389 = scmp.lt.s32.totalorder %s22, 3
      %p390 = pnand %p388, %p389
      %p391 = pneg %p390
      // Predicated region
      $region69: #{tpu_custom_call.1} parent=5 // pred_check
        _
      $region70: #{tpu_custom_call.1} parent=5 // pred_check_branch
        %393 = sbr.rel (%p390) target = $region72
      $region71: #{tpu_custom_call.1} parent=5 // pred_region
        %s394 = ssub.s32 %s22, 1
        %p395 = scmp.lt.s32.totalorder %s27, 1
        %s396 = scalar_select %p395, %s27, 1
        %s397 = smul.addr %s396, 8
        %s398 = scalar_lea.vmem %s0, %s397
        %p399 = pneg %p48
        %p400 = pneg %p45
        %p401 = pneg %p69
        %p402 = pneg %p66
        %p403 = pneg %p90
        %p404 = pneg %p87
        %p405 = pneg %p111
        %p406 = pneg %p108
        %p407 = pneg %p132
        %p408 = pneg %p129
        %p409 = pneg %p153
        %p410 = pneg %p150
        %p411 = pneg %p174
        %p412 = pneg %p171
        %p413 = pneg %p195
        %p414 = pneg %p192
        %p415 = pneg %p216
        %p416 = pneg %p213
        %p417 = pneg %p237
        %p418 = pneg %p234
        %p419 = pneg %p258
        %p420 = pneg %p255
        %p421 = pneg %p279
        %p422 = pneg %p276
        %p423 = pneg %p300
        %p424 = pneg %p297
        %p425 = pneg %p326
        %p426 = pneg %p323
        %s427 = sand.u32 %s313, 1
        %s428 = scalar_lea.sflag [#allocation4], %s427
        %s429 = sand.u32 %s313, 1
        %s430 = smul.addr %s429, 8
        %s431 = scalar_lea.vmem [#allocation3], %s430
        %p432 = scmp.lt.s32.totalorder %s27, 1
        %s433 = scalar_select %p432, %s27, 1
        %s434 = smul.addr %s433, 8
        %s435 = scalar_lea.vmem %s0, %s434
        %v436 = vld [vmem:[%s435] sm:$0xff]
        %v437 = vld [vmem:[%s1] sm:$0x1]
        %v438 = vld [vmem:[%s2] sm:$0x1]
        %vm439 = vcmask 261120
        %v440 = vsel %vm439, %v436, 0.0
        %441 = vadd.xlane.f32.xlu0 %v440
        %v442 = vpop.xlane.xlu0 %441
        %v443 = vrcp.pop 32.0
        %v444 = vmul.f32 %v442, %v443
        %v445 = vsub.f32 %v436, %v444
        %v446 = vmul.f32 %v445, %v445
        %v447 = vsel %vm439, %v446, 0.0
        %448 = vadd.xlane.f32.xlu0 %v447
        %v449 = vpop.xlane.xlu0 %448
        %v450 = vmul.f32 %v449, %v443
        %v451 = vadd.f32 %v450, 1e-05
        %v452 = vrsqrt.pop %v451
        %v453 = vmul.f32 %v445, %v452
        %v455 = vlaneseq
        %v456 = vshrl.u32 %v455, 7
        %v457 = vsub.s32 0, %v456
        %v458 = vrot.slane %v437, %v457
        %v460 = vmul.f32 %v453, %v458
        %v462 = vlaneseq
        %v463 = vshrl.u32 %v462, 7
        %v464 = vsub.s32 0, %v463
        %v465 = vrot.slane %v438, %v464
        %v467 = vadd.f32 %v460, %v465
        %v468 = vld [vmem:[%s3] sm:$0xff]
        %v469 = vld [vmem:[%s3 + $0x8] sm:$0xff]
        %v470 = vld [vmem:[%s3 + $0x10] sm:$0xff]
        %v471 = vld [vmem:[%s3 + $0x18] sm:$0xff]
        %v472 = vld [vmem:[%s4] sm:$0x1]
        %v474 = vlaneseq
        %v475 = vshrl.u32 %v474, 7
        %v476 = vsub.s32 0, %v475
        %v477 = vrot.slane %v472, %v476
        %v480 = vsel %vm439, %v467, 0
        %482 = vmatprep.subr.mxu0 0.0
        %483 = vmatpush1.msra.mxu0 %v468
        %484 = vmatprep.subr.mxu0 0.0
        %485 = vmatpush1.msra.mxu0 %v469
        %486 = vmatprep.subr.mxu0 0.0
        %487 = vmatpush1.msra.mxu0 %v470
        %488 = vmatprep.subr.mxu0 0.0
        %489 = vmatpush1.msra.mxu0 %v471
        %490 = vmatprep.subr.mxu0 0.0
        %491 = vmatpush1.msra.mxu0 0.0
        %492 = vmatprep.subr.mxu0 0.0
        %493 = vmatpush1.msra.mxu0 0.0
        %494 = vmatprep.subr.mxu0 0.0
        %495 = vmatpush1.msra.mxu0 0.0
        %496 = vmatprep.subr.mxu0 0.0
        %497 = vmatpush1.msra.mxu0 0.0
        %498 = vmatprep.subr.mxu0 0.0
        %499 = vmatpush1.msra.mxu0 0.0
        %500 = vmatprep.subr.mxu0 0.0
        %501 = vmatpush1.msra.mxu0 0.0
        %502 = vmatprep.subr.mxu0 0.0
        %503 = vmatpush1.msra.mxu0 0.0
        %504 = vmatprep.subr.mxu0 0.0
        %505 = vmatpush1.msra.mxu0 0.0
        %506 = vmatprep.subr.mxu0 0.0
        %507 = vmatpush1.msra.mxu0 0.0
        %508 = vmatprep.subr.mxu0 0.0
        %509 = vmatpush1.msra.mxu0 0.0
        %510 = vmatprep.subr.mxu0 0.0
        %511 = vmatpush1.msra.mxu0 0.0
        %512 = vmatprep.subr.mxu0 0.0
        %513 = vmatpush1.msra.mxu0 0.0
        %514 = vmatprep.subr.mxu0 0.0
        %515 = vmatpush1.msra.mxu0 0.0
        %516 = vmatprep.subr.mxu0 0.0
        %517 = vmatpush1.msra.mxu0 0.0
        %518 = vmatprep.subr.mxu0 0.0
        %519 = vmatpush1.msra.mxu0 0.0
        %520 = vmatprep.subr.mxu0 0.0
        %521 = vmatpush1.msra.mxu0 0.0
        %522 = vmatprep.subr.mxu0 0.0
        %523 = vmatpush1.msra.mxu0 0.0
        %524 = vmatprep.subr.mxu0 0.0
        %525 = vmatpush1.msra.mxu0 0.0
        %526 = vmatprep.subr.mxu0 0.0
        %527 = vmatpush1.msra.mxu0 0.0
        %528 = vmatprep.subr.mxu0 0.0
        %529 = vmatpush1.msra.mxu0 0.0
        %530 = vmatprep.subr.mxu0 0.0
        %531 = vmatpush1.msra.mxu0 0.0
        %532 = vmatprep.subr.mxu0 0.0
        %533 = vmatpush1.msra.mxu0 0.0
        %534 = vmatprep.subr.mxu0 0.0
        %535 = vmatpush1.msra.mxu0 0.0
        %536 = vmatprep.subr.mxu0 0.0
        %537 = vmatpush1.msra.mxu0 0.0
        %538 = vmatprep.subr.mxu0 0.0
        %539 = vmatpush1.msra.mxu0 0.0
        %540 = vmatprep.subr.mxu0 0.0
        %541 = vmatpush1.msra.mxu0 0.0
        %542 = vmatprep.subr.mxu0 0.0
        %543 = vmatpush1.msra.mxu0 0.0
        %544 = vmatprep.subr.mxu0 0.0
        %545 = vmatpush1.msra.mxu0 0.0
        %546 = vmatprep.mubr.f32.mxu0 0.0
        %547 = vmatmul.mubr.f32.gmra.mrb[0].mxu0 %v480
        %v548 = vpop.f32.mrb[0].mxu0
        %v549 = vadd.f32 %v477, %v548
        %v550 = vpop.f32.mrb[0].mxu0
        %551 = vdwg.mxu0
        %v552 = vmul.f32 %v549, 0.25
        %v553 = vlaneseq
        %v554 = vshrl.u32 %v553, 7
        %v555 = vlaneseq
        %v556 = vand.u32 %v555, 127
        %vm557 = vcmp.le.s32.totalorder %v556, %v554
        %v558 = vsel %vm557, 0.0, -1e+30
        %560 = vrot.lane.b32.xlu0 %v549, 96
        %v561 = vpop.permute.xlu0 %560
        %vm562 = vcmask 130048
        %v564 = vsel %vm562, %v552, 0
        %v566 = vsel %vm562, %v561, 0
        %568 = vmatprep.subr.mxu0 0.0
        %569 = vmatpush1.xpose.msra.mxu0 %v566
        %570 = vmatprep.subr.mxu0 0.0
        %571 = vmatpush1.xpose.msra.mxu0 0.0
        %572 = vmatprep.subr.mxu0 0.0
        %573 = vmatpush1.xpose.msra.mxu0 0.0
        %574 = vmatprep.subr.mxu0 0.0
        %575 = vmatpush1.xpose.msra.mxu0 0.0
        %576 = vmatprep.subr.mxu0 0.0
        %577 = vmatpush1.xpose.msra.mxu0 0.0
        %578 = vmatprep.subr.mxu0 0.0
        %579 = vmatpush1.xpose.msra.mxu0 0.0
        %580 = vmatprep.subr.mxu0 0.0
        %581 = vmatpush1.xpose.msra.mxu0 0.0
        %582 = vmatprep.subr.mxu0 0.0
        %583 = vmatpush1.xpose.msra.mxu0 0.0
        %584 = vmatprep.subr.mxu0 0.0
        %585 = vmatpush1.xpose.msra.mxu0 0.0
        %586 = vmatprep.subr.mxu0 0.0
        %587 = vmatpush1.xpose.msra.mxu0 0.0
        %588 = vmatprep.subr.mxu0 0.0
        %589 = vmatpush1.xpose.msra.mxu0 0.0
        %590 = vmatprep.subr.mxu0 0.0
        %591 = vmatpush1.xpose.msra.mxu0 0.0
        %592 = vmatprep.subr.mxu0 0.0
        %593 = vmatpush1.xpose.msra.mxu0 0.0
        %594 = vmatprep.subr.mxu0 0.0
        %595 = vmatpush1.xpose.msra.mxu0 0.0
        %596 = vmatprep.subr.mxu0 0.0
        %597 = vmatpush1.xpose.msra.mxu0 0.0
        %598 = vmatprep.subr.mxu0 0.0
        %599 = vmatpush1.xpose.msra.mxu0 0.0
        %600 = vmatprep.subr.mxu0 0.0
        %601 = vmatpush1.xpose.msra.mxu0 0.0
        %602 = vmatprep.subr.mxu0 0.0
        %603 = vmatpush1.xpose.msra.mxu0 0.0
        %604 = vmatprep.subr.mxu0 0.0
        %605 = vmatpush1.xpose.msra.mxu0 0.0
        %606 = vmatprep.subr.mxu0 0.0
        %607 = vmatpush1.xpose.msra.mxu0 0.0
        %608 = vmatprep.subr.mxu0 0.0
        %609 = vmatpush1.xpose.msra.mxu0 0.0
        %610 = vmatprep.subr.mxu0 0.0
        %611 = vmatpush1.xpose.msra.mxu0 0.0
        %612 = vmatprep.subr.mxu0 0.0
        %613 = vmatpush1.xpose.msra.mxu0 0.0
        %614 = vmatprep.subr.mxu0 0.0
        %615 = vmatpush1.xpose.msra.mxu0 0.0
        %616 = vmatprep.subr.mxu0 0.0
        %617 = vmatpush1.xpose.msra.mxu0 0.0
        %618 = vmatprep.subr.mxu0 0.0
        %619 = vmatpush1.xpose.msra.mxu0 0.0
        %620 = vmatprep.subr.mxu0 0.0
        %621 = vmatpush1.xpose.msra.mxu0 0.0
        %622 = vmatprep.subr.mxu0 0.0
        %623 = vmatpush1.xpose.msra.mxu0 0.0
        %624 = vmatprep.subr.mxu0 0.0
        %625 = vmatpush1.xpose.msra.mxu0 0.0
        %626 = vmatprep.subr.mxu0 0.0
        %627 = vmatpush1.xpose.msra.mxu0 0.0
        %628 = vmatprep.subr.mxu0 0.0
        %629 = vmatpush1.xpose.msra.mxu0 0.0
        %630 = vmatprep.subr.mxu0 0.0
        %631 = vmatpush1.xpose.msra.mxu0 0.0
        %632 = vmatprep.mubr.f32.mxu0 0.0
        %633 = vmatmul.mubr.f32.gmra.mrb[0].mxu0 %v564
        %v634 = vpop.f32.mrb[0].mxu0
        %v635 = vadd.f32 %v558, %v634
        %v636 = vpop.f32.mrb[0].mxu0
        %637 = vdwg.mxu0
        %vm638 = vcmask 64512
        %v639 = vsel %vm638, %v635, -inf
        %640 = vmax.xlane.f32.xlu0 %v639
        %v641 = vpop.xlane.xlu0 %640
        %v642 = vsub.f32 %v635, %v641
        %v643 = vmul.f32 %v642, 1.442695
        %v644 = vpow.pop %v643
        %v645 = vsel %vm638, %v644, 0.0
        %646 = vadd.xlane.f32.xlu0 %v645
        %v647 = vpop.xlane.xlu0 %646
        %v648 = vrcp.pop %v647
        %v649 = vmul.f32 %v644, %v648
        %650 = vrot.lane.b32.xlu0 %v549, 64
        %v651 = vpop.permute.xlu0 %650
        %v654 = vsel %vm638, %v649, 0
        %656 = vmatprep.subr.mxu0 0.0
        %657 = vmatpush1.msra.mxu0 %v651
        %658 = vmatprep.subr.mxu0 0.0
        %659 = vmatpush1.msra.mxu0 0.0
        %660 = vmatprep.subr.mxu0 0.0
        %661 = vmatpush1.msra.mxu0 0.0
        %662 = vmatprep.subr.mxu0 0.0
        %663 = vmatpush1.msra.mxu0 0.0
        %664 = vmatprep.subr.mxu0 0.0
        %665 = vmatpush1.msra.mxu0 0.0
        %666 = vmatprep.subr.mxu0 0.0
        %667 = vmatpush1.msra.mxu0 0.0
        %668 = vmatprep.subr.mxu0 0.0
        %669 = vmatpush1.msra.mxu0 0.0
        %670 = vmatprep.subr.mxu0 0.0
        %671 = vmatpush1.msra.mxu0 0.0
        %672 = vmatprep.subr.mxu0 0.0
        %673 = vmatpush1.msra.mxu0 0.0
        %674 = vmatprep.subr.mxu0 0.0
        %675 = vmatpush1.msra.mxu0 0.0
        %676 = vmatprep.subr.mxu0 0.0
        %677 = vmatpush1.msra.mxu0 0.0
        %678 = vmatprep.subr.mxu0 0.0
        %679 = vmatpush1.msra.mxu0 0.0
        %680 = vmatprep.subr.mxu0 0.0
        %681 = vmatpush1.msra.mxu0 0.0
        %682 = vmatprep.subr.mxu0 0.0
        %683 = vmatpush1.msra.mxu0 0.0
        %684 = vmatprep.subr.mxu0 0.0
        %685 = vmatpush1.msra.mxu0 0.0
        %686 = vmatprep.subr.mxu0 0.0
        %687 = vmatpush1.msra.mxu0 0.0
        %688 = vmatprep.subr.mxu0 0.0
        %689 = vmatpush1.msra.mxu0 0.0
        %690 = vmatprep.subr.mxu0 0.0
        %691 = vmatpush1.msra.mxu0 0.0
        %692 = vmatprep.subr.mxu0 0.0
        %693 = vmatpush1.msra.mxu0 0.0
        %694 = vmatprep.subr.mxu0 0.0
        %695 = vmatpush1.msra.mxu0 0.0
        %696 = vmatprep.subr.mxu0 0.0
        %697 = vmatpush1.msra.mxu0 0.0
        %698 = vmatprep.subr.mxu0 0.0
        %699 = vmatpush1.msra.mxu0 0.0
        %700 = vmatprep.subr.mxu0 0.0
        %701 = vmatpush1.msra.mxu0 0.0
        %702 = vmatprep.subr.mxu0 0.0
        %703 = vmatpush1.msra.mxu0 0.0
        %704 = vmatprep.subr.mxu0 0.0
        %705 = vmatpush1.msra.mxu0 0.0
        %706 = vmatprep.subr.mxu0 0.0
        %707 = vmatpush1.msra.mxu0 0.0
        %708 = vmatprep.subr.mxu0 0.0
        %709 = vmatpush1.msra.mxu0 0.0
        %710 = vmatprep.subr.mxu0 0.0
        %711 = vmatpush1.msra.mxu0 0.0
        %712 = vmatprep.subr.mxu0 0.0
        %713 = vmatpush1.msra.mxu0 0.0
        %714 = vmatprep.subr.mxu0 0.0
        %715 = vmatpush1.msra.mxu0 0.0
        %716 = vmatprep.subr.mxu0 0.0
        %717 = vmatpush1.msra.mxu0 0.0
        %718 = vmatprep.subr.mxu0 0.0
        %719 = vmatpush1.msra.mxu0 0.0
        %720 = vmatprep.mubr.f32.mxu0 0.0
        %721 = vmatmul.mubr.f32.gmra.mrb[0].mxu0 %v654
        %v722 = vpop.f32.mrb[0].mxu0
        %v723 = vadd.f32 0.0, %v722
        %v724 = vpop.f32.mrb[0].mxu0
        %725 = vdwg.mxu0
        %726 = vst.msk [vmem:[#allocation2] sm:$0xff] %vm562, %v723
        %727 = vrot.lane.b32.xlu0 %v552, 112
        %v728 = vpop.permute.xlu0 %727
        %729 = vrot.lane.b32.xlu0 %v549, 80
        %v730 = vpop.permute.xlu0 %729
        %v731 = vsel %vm562, %v728, 0
        %v733 = vsel %vm562, %v730, 0
        %735 = vmatprep.subr.mxu0 0.0
        %736 = vmatpush1.xpose.msra.mxu0 %v733
        %737 = vmatprep.subr.mxu0 0.0
        %738 = vmatpush1.xpose.msra.mxu0 0.0
        %739 = vmatprep.subr.mxu0 0.0
        %740 = vmatpush1.xpose.msra.mxu0 0.0
        %741 = vmatprep.subr.mxu0 0.0
        %742 = vmatpush1.xpose.msra.mxu0 0.0
        %743 = vmatprep.subr.mxu0 0.0
        %744 = vmatpush1.xpose.msra.mxu0 0.0
        %745 = vmatprep.subr.mxu0 0.0
        %746 = vmatpush1.xpose.msra.mxu0 0.0
        %747 = vmatprep.subr.mxu0 0.0
        %748 = vmatpush1.xpose.msra.mxu0 0.0
        %749 = vmatprep.subr.mxu0 0.0
        %750 = vmatpush1.xpose.msra.mxu0 0.0
        %751 = vmatprep.subr.mxu0 0.0
        %752 = vmatpush1.xpose.msra.mxu0 0.0
        %753 = vmatprep.subr.mxu0 0.0
        %754 = vmatpush1.xpose.msra.mxu0 0.0
        %755 = vmatprep.subr.mxu0 0.0
        %756 = vmatpush1.xpose.msra.mxu0 0.0
        %757 = vmatprep.subr.mxu0 0.0
        %758 = vmatpush1.xpose.msra.mxu0 0.0
        %759 = vmatprep.subr.mxu0 0.0
        %760 = vmatpush1.xpose.msra.mxu0 0.0
        %761 = vmatprep.subr.mxu0 0.0
        %762 = vmatpush1.xpose.msra.mxu0 0.0
        %763 = vmatprep.subr.mxu0 0.0
        %764 = vmatpush1.xpose.msra.mxu0 0.0
        %765 = vmatprep.subr.mxu0 0.0
        %766 = vmatpush1.xpose.msra.mxu0 0.0
        %767 = vmatprep.subr.mxu0 0.0
        %768 = vmatpush1.xpose.msra.mxu0 0.0
        %769 = vmatprep.subr.mxu0 0.0
        %770 = vmatpush1.xpose.msra.mxu0 0.0
        %771 = vmatprep.subr.mxu0 0.0
        %772 = vmatpush1.xpose.msra.mxu0 0.0
        %773 = vmatprep.subr.mxu0 0.0
        %774 = vmatpush1.xpose.msra.mxu0 0.0
        %775 = vmatprep.subr.mxu0 0.0
        %776 = vmatpush1.xpose.msra.mxu0 0.0
        %777 = vmatprep.subr.mxu0 0.0
        %778 = vmatpush1.xpose.msra.mxu0 0.0
        %779 = vmatprep.subr.mxu0 0.0
        %780 = vmatpush1.xpose.msra.mxu0 0.0
        %781 = vmatprep.subr.mxu0 0.0
        %782 = vmatpush1.xpose.msra.mxu0 0.0
        %783 = vmatprep.subr.mxu0 0.0
        %784 = vmatpush1.xpose.msra.mxu0 0.0
        %785 = vmatprep.subr.mxu0 0.0
        %786 = vmatpush1.xpose.msra.mxu0 0.0
        %787 = vmatprep.subr.mxu0 0.0
        %788 = vmatpush1.xpose.msra.mxu0 0.0
        %789 = vmatprep.subr.mxu0 0.0
        %790 = vmatpush1.xpose.msra.mxu0 0.0
        %791 = vmatprep.subr.mxu0 0.0
        %792 = vmatpush1.xpose.msra.mxu0 0.0
        %793 = vmatprep.subr.mxu0 0.0
        %794 = vmatpush1.xpose.msra.mxu0 0.0
        %795 = vmatprep.subr.mxu0 0.0
        %796 = vmatpush1.xpose.msra.mxu0 0.0
        %797 = vmatprep.subr.mxu0 0.0
        %798 = vmatpush1.xpose.msra.mxu0 0.0
        %799 = vmatprep.mubr.f32.mxu0 0.0
        %800 = vmatmul.mubr.f32.gmra.mrb[0].mxu0 %v731
        %v801 = vpop.f32.mrb[0].mxu0
        %v802 = vadd.f32 %v558, %v801
        %v803 = vpop.f32.mrb[0].mxu0
        %804 = vdwg.mxu0
        %v805 = vsel %vm638, %v802, -inf
        %806 = vmax.xlane.f32.xlu0 %v805
        %v807 = vpop.xlane.xlu0 %806
        %v808 = vsub.f32 %v802, %v807
        %v809 = vmul.f32 %v808, 1.442695
        %v810 = vpow.pop %v809
        %v811 = vsel %vm638, %v810, 0.0
        %812 = vadd.xlane.f32.xlu0 %v811
        %v813 = vpop.xlane.xlu0 %812
        %v814 = vrcp.pop %v813
        %v815 = vmul.f32 %v810, %v814
        %816 = vrot.lane.b32.xlu0 %v549, 48
        %v817 = vpop.permute.xlu0 %816
        %v820 = vsel %vm638, %v815, 0
        %822 = vmatprep.subr.mxu0 0.0
        %823 = vmatpush1.msra.mxu0 %v817
        %824 = vmatprep.subr.mxu0 0.0
        %825 = vmatpush1.msra.mxu0 0.0
        %826 = vmatprep.subr.mxu0 0.0
        %827 = vmatpush1.msra.mxu0 0.0
        %828 = vmatprep.subr.mxu0 0.0
        %829 = vmatpush1.msra.mxu0 0.0
        %830 = vmatprep.subr.mxu0 0.0
        %831 = vmatpush1.msra.mxu0 0.0
        %832 = vmatprep.subr.mxu0 0.0
        %833 = vmatpush1.msra.mxu0 0.0
        %834 = vmatprep.subr.mxu0 0.0
        %835 = vmatpush1.msra.mxu0 0.0
        %836 = vmatprep.subr.mxu0 0.0
        %837 = vmatpush1.msra.mxu0 0.0
        %838 = vmatprep.subr.mxu0 0.0
        %839 = vmatpush1.msra.mxu0 0.0
        %840 = vmatprep.subr.mxu0 0.0
        %841 = vmatpush1.msra.mxu0 0.0
        %842 = vmatprep.subr.mxu0 0.0
        %843 = vmatpush1.msra.mxu0 0.0
        %844 = vmatprep.subr.mxu0 0.0
        %845 = vmatpush1.msra.mxu0 0.0
        %846 = vmatprep.subr.mxu0 0.0
        %847 = vmatpush1.msra.mxu0 0.0
        %848 = vmatprep.subr.mxu0 0.0
        %849 = vmatpush1.msra.mxu0 0.0
        %850 = vmatprep.subr.mxu0 0.0
        %851 = vmatpush1.msra.mxu0 0.0
        %852 = vmatprep.subr.mxu0 0.0
        %853 = vmatpush1.msra.mxu0 0.0
        %854 = vmatprep.subr.mxu0 0.0
        %855 = vmatpush1.msra.mxu0 0.0
        %856 = vmatprep.subr.mxu0 0.0
        %857 = vmatpush1.msra.mxu0 0.0
        %858 = vmatprep.subr.mxu0 0.0
        %859 = vmatpush1.msra.mxu0 0.0
        %860 = vmatprep.subr.mxu0 0.0
        %861 = vmatpush1.msra.mxu0 0.0
        %862 = vmatprep.subr.mxu0 0.0
        %863 = vmatpush1.msra.mxu0 0.0
        %864 = vmatprep.subr.mxu0 0.0
        %865 = vmatpush1.msra.mxu0 0.0
        %866 = vmatprep.subr.mxu0 0.0
        %867 = vmatpush1.msra.mxu0 0.0
        %868 = vmatprep.subr.mxu0 0.0
        %869 = vmatpush1.msra.mxu0 0.0
        %870 = vmatprep.subr.mxu0 0.0
        %871 = vmatpush1.msra.mxu0 0.0
        %872 = vmatprep.subr.mxu0 0.0
        %873 = vmatpush1.msra.mxu0 0.0
        %874 = vmatprep.subr.mxu0 0.0
        %875 = vmatpush1.msra.mxu0 0.0
        %876 = vmatprep.subr.mxu0 0.0
        %877 = vmatpush1.msra.mxu0 0.0
        %878 = vmatprep.subr.mxu0 0.0
        %879 = vmatpush1.msra.mxu0 0.0
        %880 = vmatprep.subr.mxu0 0.0
        %881 = vmatpush1.msra.mxu0 0.0
        %882 = vmatprep.subr.mxu0 0.0
        %883 = vmatpush1.msra.mxu0 0.0
        %884 = vmatprep.subr.mxu0 0.0
        %885 = vmatpush1.msra.mxu0 0.0
        %886 = vmatprep.mubr.f32.mxu0 0.0
        %887 = vmatmul.mubr.f32.gmra.mrb[0].mxu0 %v820
        %v888 = vpop.f32.mrb[0].mxu0
        %v889 = vadd.f32 0.0, %v888
        %v890 = vpop.f32.mrb[0].mxu0
        %891 = vdwg.mxu0
        %893 = vrot.lane.b32.xlu0 %v889, 16
        %v894 = vpop.permute.xlu0 %893
        %vm896 = vcmask 261248
        %897 = vst.msk [vmem:[#allocation2] sm:$0xff] %vm896, %v894
        %v898 = vld [vmem:[#allocation2] sm:$0xff]
        %v899 = vld [vmem:[%s5] sm:$0xff]
        %v900 = vld [vmem:[%s5 + $0x8] sm:$0xff]
        %v901 = vld [vmem:[%s5 + $0x10] sm:$0xff]
        %v902 = vld [vmem:[%s5 + $0x18] sm:$0xff]
        %v903 = vld [vmem:[%s6] sm:$0x1]
        %v905 = vlaneseq
        %v906 = vshrl.u32 %v905, 7
        %v907 = vsub.s32 0, %v906
        %v908 = vrot.slane %v903, %v907
        %v911 = vsel %vm439, %v898, 0
        %913 = vmatprep.subr.mxu0 0.0
        %914 = vmatpush1.msra.mxu0 %v899
        %915 = vmatprep.subr.mxu0 0.0
        %916 = vmatpush1.msra.mxu0 %v900
        %917 = vmatprep.subr.mxu0 0.0
        %918 = vmatpush1.msra.mxu0 %v901
        %919 = vmatprep.subr.mxu0 0.0
        %920 = vmatpush1.msra.mxu0 %v902
        %921 = vmatprep.subr.mxu0 0.0
        %922 = vmatpush1.msra.mxu0 0.0
        %923 = vmatprep.subr.mxu0 0.0
        %924 = vmatpush1.msra.mxu0 0.0
        %925 = vmatprep.subr.mxu0 0.0
        %926 = vmatpush1.msra.mxu0 0.0
        %927 = vmatprep.subr.mxu0 0.0
        %928 = vmatpush1.msra.mxu0 0.0
        %929 = vmatprep.subr.mxu0 0.0
        %930 = vmatpush1.msra.mxu0 0.0
        %931 = vmatprep.subr.mxu0 0.0
        %932 = vmatpush1.msra.mxu0 0.0
        %933 = vmatprep.subr.mxu0 0.0
        %934 = vmatpush1.msra.mxu0 0.0
        %935 = vmatprep.subr.mxu0 0.0
        %936 = vmatpush1.msra.mxu0 0.0
        %937 = vmatprep.subr.mxu0 0.0
        %938 = vmatpush1.msra.mxu0 0.0
        %939 = vmatprep.subr.mxu0 0.0
        %940 = vmatpush1.msra.mxu0 0.0
        %941 = vmatprep.subr.mxu0 0.0
        %942 = vmatpush1.msra.mxu0 0.0
        %943 = vmatprep.subr.mxu0 0.0
        %944 = vmatpush1.msra.mxu0 0.0
        %945 = vmatprep.subr.mxu0 0.0
        %946 = vmatpush1.msra.mxu0 0.0
        %947 = vmatprep.subr.mxu0 0.0
        %948 = vmatpush1.msra.mxu0 0.0
        %949 = vmatprep.subr.mxu0 0.0
        %950 = vmatpush1.msra.mxu0 0.0
        %951 = vmatprep.subr.mxu0 0.0
        %952 = vmatpush1.msra.mxu0 0.0
        %953 = vmatprep.subr.mxu0 0.0
        %954 = vmatpush1.msra.mxu0 0.0
        %955 = vmatprep.subr.mxu0 0.0
        %956 = vmatpush1.msra.mxu0 0.0
        %957 = vmatprep.subr.mxu0 0.0
        %958 = vmatpush1.msra.mxu0 0.0
        %959 = vmatprep.subr.mxu0 0.0
        %960 = vmatpush1.msra.mxu0 0.0
        %961 = vmatprep.subr.mxu0 0.0
        %962 = vmatpush1.msra.mxu0 0.0
        %963 = vmatprep.subr.mxu0 0.0
        %964 = vmatpush1.msra.mxu0 0.0
        %965 = vmatprep.subr.mxu0 0.0
        %966 = vmatpush1.msra.mxu0 0.0
        %967 = vmatprep.subr.mxu0 0.0
        %968 = vmatpush1.msra.mxu0 0.0
        %969 = vmatprep.subr.mxu0 0.0
        %970 = vmatpush1.msra.mxu0 0.0
        %971 = vmatprep.subr.mxu0 0.0
        %972 = vmatpush1.msra.mxu0 0.0
        %973 = vmatprep.subr.mxu0 0.0
        %974 = vmatpush1.msra.mxu0 0.0
        %975 = vmatprep.subr.mxu0 0.0
        %976 = vmatpush1.msra.mxu0 0.0
        %977 = vmatprep.mubr.f32.mxu0 0.0
        %978 = vmatmul.mubr.f32.gmra.mrb[0].mxu0 %v911
        %v979 = vpop.f32.mrb[0].mxu0
        %v980 = vadd.f32 %v908, %v979
        %v981 = vpop.f32.mrb[0].mxu0
        %982 = vdwg.mxu0
        %v983 = vadd.f32 %v436, %v980
        %v984 = vld [vmem:[%s7] sm:$0x1]
        %v985 = vld [vmem:[%s8] sm:$0x1]
        %v986 = vsel %vm439, %v983, 0.0
        %987 = vadd.xlane.f32.xlu0 %v986
        %v988 = vpop.xlane.xlu0 %987
        %v989 = vmul.f32 %v988, %v443
        %v990 = vsub.f32 %v983, %v989
        %v991 = vmul.f32 %v990, %v990
        %v992 = vsel %vm439, %v991, 0.0
        %993 = vadd.xlane.f32.xlu0 %v992
        %v994 = vpop.xlane.xlu0 %993
        %v995 = vmul.f32 %v994, %v443
        %v996 = vadd.f32 %v995, 1e-05
        %v997 = vrsqrt.pop %v996
        %v998 = vmul.f32 %v990, %v997
        %v1000 = vlaneseq
        %v1001 = vshrl.u32 %v1000, 7
        %v1002 = vsub.s32 0, %v1001
        %v1003 = vrot.slane %v984, %v1002
        %v1005 = vmul.f32 %v998, %v1003
        %v1007 = vlaneseq
        %v1008 = vshrl.u32 %v1007, 7
        %v1009 = vsub.s32 0, %v1008
        %v1010 = vrot.slane %v985, %v1009
        %v1012 = vadd.f32 %v1005, %v1010
        %v1013 = vld [vmem:[%s9] sm:$0xff]
        %v1014 = vld [vmem:[%s9 + $0x8] sm:$0xff]
        %v1015 = vld [vmem:[%s9 + $0x10] sm:$0xff]
        %v1016 = vld [vmem:[%s9 + $0x18] sm:$0xff]
        %v1017 = vld [vmem:[%s10] sm:$0x1]
        %v1019 = vlaneseq
        %v1020 = vshrl.u32 %v1019, 7
        %v1021 = vsub.s32 0, %v1020
        %v1022 = vrot.slane %v1017, %v1021
        %v1025 = vsel %vm439, %v1012, 0
        %1027 = vmatprep.subr.mxu0 0.0
        %1028 = vmatpush1.msra.mxu0 %v1013
        %1029 = vmatprep.subr.mxu0 0.0
        %1030 = vmatpush1.msra.mxu0 %v1014
        %1031 = vmatprep.subr.mxu0 0.0
        %1032 = vmatpush1.msra.mxu0 %v1015
        %1033 = vmatprep.subr.mxu0 0.0
        %1034 = vmatpush1.msra.mxu0 %v1016
        %1035 = vmatprep.subr.mxu0 0.0
        %1036 = vmatpush1.msra.mxu0 0.0
        %1037 = vmatprep.subr.mxu0 0.0
        %1038 = vmatpush1.msra.mxu0 0.0
        %1039 = vmatprep.subr.mxu0 0.0
        %1040 = vmatpush1.msra.mxu0 0.0
        %1041 = vmatprep.subr.mxu0 0.0
        %1042 = vmatpush1.msra.mxu0 0.0
        %1043 = vmatprep.subr.mxu0 0.0
        %1044 = vmatpush1.msra.mxu0 0.0
        %1045 = vmatprep.subr.mxu0 0.0
        %1046 = vmatpush1.msra.mxu0 0.0
        %1047 = vmatprep.subr.mxu0 0.0
        %1048 = vmatpush1.msra.mxu0 0.0
        %1049 = vmatprep.subr.mxu0 0.0
        %1050 = vmatpush1.msra.mxu0 0.0
        %1051 = vmatprep.subr.mxu0 0.0
        %1052 = vmatpush1.msra.mxu0 0.0
        %1053 = vmatprep.subr.mxu0 0.0
        %1054 = vmatpush1.msra.mxu0 0.0
        %1055 = vmatprep.subr.mxu0 0.0
        %1056 = vmatpush1.msra.mxu0 0.0
        %1057 = vmatprep.subr.mxu0 0.0
        %1058 = vmatpush1.msra.mxu0 0.0
        %1059 = vmatprep.subr.mxu0 0.0
        %1060 = vmatpush1.msra.mxu0 0.0
        %1061 = vmatprep.subr.mxu0 0.0
        %1062 = vmatpush1.msra.mxu0 0.0
        %1063 = vmatprep.subr.mxu0 0.0
        %1064 = vmatpush1.msra.mxu0 0.0
        %1065 = vmatprep.subr.mxu0 0.0
        %1066 = vmatpush1.msra.mxu0 0.0
        %1067 = vmatprep.subr.mxu0 0.0
        %1068 = vmatpush1.msra.mxu0 0.0
        %1069 = vmatprep.subr.mxu0 0.0
        %1070 = vmatpush1.msra.mxu0 0.0
        %1071 = vmatprep.subr.mxu0 0.0
        %1072 = vmatpush1.msra.mxu0 0.0
        %1073 = vmatprep.subr.mxu0 0.0
        %1074 = vmatpush1.msra.mxu0 0.0
        %1075 = vmatprep.subr.mxu0 0.0
        %1076 = vmatpush1.msra.mxu0 0.0
        %1077 = vmatprep.subr.mxu0 0.0
        %1078 = vmatpush1.msra.mxu0 0.0
        %1079 = vmatprep.subr.mxu0 0.0
        %1080 = vmatpush1.msra.mxu0 0.0
        %1081 = vmatprep.subr.mxu0 0.0
        %1082 = vmatpush1.msra.mxu0 0.0
        %1083 = vmatprep.subr.mxu0 0.0
        %1084 = vmatpush1.msra.mxu0 0.0
        %1085 = vmatprep.subr.mxu0 0.0
        %1086 = vmatpush1.msra.mxu0 0.0
        %1087 = vmatprep.subr.mxu0 0.0
        %1088 = vmatpush1.msra.mxu0 0.0
        %1089 = vmatprep.subr.mxu0 0.0
        %1090 = vmatpush1.msra.mxu0 0.0
        %1091 = vmatprep.mubr.f32.mxu0 0.0
        %1092 = vmatmul.mubr.f32.gmra.mrb[0].mxu0 %v1025
        %v1093 = vpop.f32.mrb[0].mxu0
        %v1094 = vadd.f32 %v1022, %v1093
        %v1095 = vpop.f32.mrb[0].mxu0
        %1096 = vdwg.mxu0
        %v1097 = vmul.f32 %v1094, 0.5
        %v1098 = vmul.f32 %v1094, 0.70710677
        %v1099 = vand.u32 2147483647, %v1098
        %v1100 = vmul.f32 %v1099, 0.3275911
        %v1101 = vadd.f32 %v1100, 1.0
        %v1102 = vrcp.pop %v1101
        %v1103 = vmul.f32 1.0, %v1102
        %v1104 = vmul.f32 %v1103, 1.0614054
        %v1105 = vadd.f32 %v1104, -1.4531521
        %v1106 = vmul.f32 %v1105, %v1103
        %v1107 = vadd.f32 %v1106, 1.4214138
        %v1108 = vmul.f32 %v1107, %v1103
        %v1109 = vadd.f32 %v1108, -0.28449672
        %v1110 = vmul.f32 %v1109, %v1103
        %v1111 = vadd.f32 %v1110, 0.2548296
        %v1112 = vmul.f32 %v1111, %v1103
        %v1113 = vsub.f32 0.0, %v1099
        %v1114 = vmul.f32 %v1113, %v1099
        %v1115 = vmul.f32 %v1114, 1.442695
        %v1116 = vpow.pop %v1115
        %v1117 = vmul.f32 %v1112, %v1116
        %v1118 = vsub.f32 1.0, %v1117
        %vm1119 = vcmp.ge.f32.partialorder %v1098, 0.0
        %v1120 = vsub.f32 0.0, %v1118
        %v1121 = vsel %vm1119, %v1118, %v1120
        %v1122 = vadd.f32 %v1121, 1.0
        %v1123 = vmul.f32 %v1097, %v1122
        %v1124 = vld [vmem:[%s11] sm:$0xff]
        %v1125 = vld [vmem:[%s11 + $0x8] sm:$0xff]
        %v1126 = vld [vmem:[%s11 + $0x10] sm:$0xff]
        %v1127 = vld [vmem:[%s11 + $0x18] sm:$0xff]
        %v1128 = vld [vmem:[%s11 + $0x20] sm:$0xff]
        %v1129 = vld [vmem:[%s11 + $0x28] sm:$0xff]
        %v1130 = vld [vmem:[%s11 + $0x30] sm:$0xff]
        %v1131 = vld [vmem:[%s11 + $0x38] sm:$0xff]
        %v1132 = vld [vmem:[%s11 + $0x40] sm:$0xff]
        %v1133 = vld [vmem:[%s11 + $0x48] sm:$0xff]
        %v1134 = vld [vmem:[%s11 + $0x50] sm:$0xff]
        %v1135 = vld [vmem:[%s11 + $0x58] sm:$0xff]
        %v1136 = vld [vmem:[%s11 + $0x60] sm:$0xff]
        %v1137 = vld [vmem:[%s11 + $0x68] sm:$0xff]
        %v1138 = vld [vmem:[%s11 + $0x70] sm:$0xff]
        %v1139 = vld [vmem:[%s11 + $0x78] sm:$0xff]
        %v1140 = vld [vmem:[%s12] sm:$0x1]
        %v1142 = vlaneseq
        %v1143 = vshrl.u32 %v1142, 7
        %v1144 = vsub.s32 0, %v1143
        %v1145 = vrot.slane %v1140, %v1144
        %1147 = vmatprep.subr.mxu0 0.0
        %1148 = vmatpush1.msra.mxu0 %v1124
        %1149 = vmatprep.subr.mxu0 0.0
        %1150 = vmatpush1.msra.mxu0 %v1125
        %1151 = vmatprep.subr.mxu0 0.0
        %1152 = vmatpush1.msra.mxu0 %v1126
        %1153 = vmatprep.subr.mxu0 0.0
        %1154 = vmatpush1.msra.mxu0 %v1127
        %1155 = vmatprep.subr.mxu0 0.0
        %1156 = vmatpush1.msra.mxu0 %v1128
        %1157 = vmatprep.subr.mxu0 0.0
        %1158 = vmatpush1.msra.mxu0 %v1129
        %1159 = vmatprep.subr.mxu0 0.0
        %1160 = vmatpush1.msra.mxu0 %v1130
        %1161 = vmatprep.subr.mxu0 0.0
        %1162 = vmatpush1.msra.mxu0 %v1131
        %1163 = vmatprep.subr.mxu0 0.0
        %1164 = vmatpush1.msra.mxu0 %v1132
        %1165 = vmatprep.subr.mxu0 0.0
        %1166 = vmatpush1.msra.mxu0 %v1133
        %1167 = vmatprep.subr.mxu0 0.0
        %1168 = vmatpush1.msra.mxu0 %v1134
        %1169 = vmatprep.subr.mxu0 0.0
        %1170 = vmatpush1.msra.mxu0 %v1135
        %1171 = vmatprep.subr.mxu0 0.0
        %1172 = vmatpush1.msra.mxu0 %v1136
        %1173 = vmatprep.subr.mxu0 0.0
        %1174 = vmatpush1.msra.mxu0 %v1137
        %1175 = vmatprep.subr.mxu0 0.0
        %1176 = vmatpush1.msra.mxu0 %v1138
        %1177 = vmatprep.subr.mxu0 0.0
        %1178 = vmatpush1.msra.mxu0 %v1139
        %1179 = vmatprep.subr.mxu0 0.0
        %1180 = vmatpush1.msra.mxu0 0.0
        %1181 = vmatprep.subr.mxu0 0.0
        %1182 = vmatpush1.msra.mxu0 0.0
        %1183 = vmatprep.subr.mxu0 0.0
        %1184 = vmatpush1.msra.mxu0 0.0
        %1185 = vmatprep.subr.mxu0 0.0
        %1186 = vmatpush1.msra.mxu0 0.0
        %1187 = vmatprep.subr.mxu0 0.0
        %1188 = vmatpush1.msra.mxu0 0.0
        %1189 = vmatprep.subr.mxu0 0.0
        %1190 = vmatpush1.msra.mxu0 0.0
        %1191 = vmatprep.subr.mxu0 0.0
        %1192 = vmatpush1.msra.mxu0 0.0
        %1193 = vmatprep.subr.mxu0 0.0
        %1194 = vmatpush1.msra.mxu0 0.0
        %1195 = vmatprep.subr.mxu0 0.0
        %1196 = vmatpush1.msra.mxu0 0.0
        %1197 = vmatprep.subr.mxu0 0.0
        %1198 = vmatpush1.msra.mxu0 0.0
        %1199 = vmatprep.subr.mxu0 0.0
        %1200 = vmatpush1.msra.mxu0 0.0
        %1201 = vmatprep.subr.mxu0 0.0
        %1202 = vmatpush1.msra.mxu0 0.0
        %1203 = vmatprep.subr.mxu0 0.0
        %1204 = vmatpush1.msra.mxu0 0.0
        %1205 = vmatprep.subr.mxu0 0.0
        %1206 = vmatpush1.msra.mxu0 0.0
        %1207 = vmatprep.subr.mxu0 0.0
        %1208 = vmatpush1.msra.mxu0 0.0
        %1209 = vmatprep.subr.mxu0 0.0
        %1210 = vmatpush1.msra.mxu0 0.0
        %1211 = vmatprep.mubr.f32.mxu0 0.0
        %1212 = vmatmul.mubr.f32.gmra.mrb[0].mxu0 %v1123
        %v1213 = vpop.f32.mrb[0].mxu0
        %v1214 = vadd.f32 %v1145, %v1213
        %v1215 = vpop.f32.mrb[0].mxu0
        %1216 = vdwg.mxu0
        %v1217 = vadd.f32 %v983, %v1214
        %1218 = vst.msk [vmem:[%s431] sm:$0xff] %vm439, %v1217
        %s1219 = sand.u32 %s313, 1
        %s1220 = scalar_lea.sflag [#allocation4], %s1219
        %s1221 = sand.u32 %s313, 1
        %s1222 = smul.addr %s1221, 8
        %s1223 = scalar_lea.vmem [#allocation3], %s1222
        // Predicated region
        $region73: #{tpu_custom_call.1} parent=71 // pred_check
          %p1224 = pneg %p323
        $region74: #{tpu_custom_call.1} parent=71 // pred_check_branch
          %1226 = sbr.rel (%p1224) target = $region76
        $region75: #{tpu_custom_call.1} parent=71 // pred_region
          %s1228 = ssub.s32 128, 128
          %1229 = vsyncadd %s1220, %s1228
          %s1230 = smul.addr %s27, 128
          %s1231 = scalar_lea.hbm %s13, %s1230
          %s1233 = sshll.u32 %s1223, 4
          %s1234 = int_to_ptr.vmem [resolvable:$true] %s1233
          %1236 = dma.vmem_to_hbm [thread:$0]  %s1234, 128, %s1231, %s1220
        $region76: #{tpu_custom_call.1} parent=71 // pred_fallthru
          _
      $region72: #{tpu_custom_call.1} parent=5 // pred_fallthru
        _
      %p1237 = scmp.le.s32.totalorder 2, %s22
      // Predicated region
      $region77: #{tpu_custom_call.1} parent=5 // pred_check
        %p1238 = pneg %p1237
      $region78: #{tpu_custom_call.1} parent=5 // pred_check_branch
        %1240 = sbr.rel (%p1238) target = $region80
      $region79: #{tpu_custom_call.1} parent=5 // pred_region
        %s1241 = ssub.s32 %s22, 2
        // Predicated region
        $region81: #{tpu_custom_call.1} parent=79 // pred_check
          %p1242 = pneg %p329
        $region82: #{tpu_custom_call.1} parent=79 // pred_check_branch
          %1244 = sbr.rel (%p1242) target = $region84
        $region83: #{tpu_custom_call.1} parent=79 // pred_region
          %s1245 = sand.u32 %s314, 1
          %s1246 = scalar_lea.sflag [#allocation4], %s1245
          %s1247 = sand.u32 %s314, 1
          %s1248 = smul.addr %s1247, 8
          %s1249 = scalar_lea.vmem [#allocation3], %s1248
          %1250 = dma.done %s1246, 128
        $region84: #{tpu_custom_call.1} parent=79 // pred_fallthru
          _
      $region80: #{tpu_custom_call.1} parent=5 // pred_fallthru
        _
    $region6: #{tpu_custom_call.1} parent=1 // loop_footer
      %s26 = sadd.s32 1, %s22
    $region7: #{tpu_custom_call.1} parent=1 // loop_footer_branch
      %21 = sbr.rel target = $region3
    $region8: #{tpu_custom_call.1} parent=1 // loop_exit
      _
    %1251 = vsyncpa [#allocation4], 1
    %s1252 = scalar_lea.sflag [#allocation4], 1
    %1253 = vsyncpa %s1252, 1

</llo_original>
